<compile_context>
chip_gen: v6e
topology: v6e:2x2x1
jax: 0.10.0
libtpu: 0.0.40
codegen_flags: <defaults>
</compile_context>

<pallas_src>
import functools

import jax
import jax.numpy as jnp
from jax import lax
from jax.experimental import pallas as pl
from jax.experimental.pallas import tpu as pltpu

LANE = 128        # lane width / MXU alignment target
EDGE_TILE = 128   # edges processed per grid step in the edge-phase kernel


def _round_up(v, m):
    return (v + m - 1) // m * m


def _pad2(x, rows, cols):
    return jnp.pad(x, ((0, rows - x.shape[0]), (0, cols - x.shape[1])))


# ----------------------------------------------------------------------------
# Kernel A: node phase (GCN x2 + hoisted edge-MLP first layer).
# ----------------------------------------------------------------------------
def node_phase_kernel(a_ref, x_ref,
                      w1_ref, b1_ref,
                      w2_ref, b2_ref,
                      w3a_ref, w3b_ref,
                      u_ref, v_ref):
    a = a_ref[...]                                   # bf16 [Np, Np]

    # GCN layer 1: linear -> propagate -> bias -> relu (bf16 MXU, f32 acc)
    xw = jnp.dot(x_ref[...], w1_ref[...], preferred_element_type=jnp.float32)
    h = jnp.dot(a, xw.astype(jnp.bfloat16),
                preferred_element_type=jnp.float32) + b1_ref[...]
    h = jnp.maximum(h, 0.0).astype(jnp.bfloat16)

    # GCN layer 2
    hw = jnp.dot(h, w2_ref[...], preferred_element_type=jnp.float32)
    h2 = jnp.dot(a, hw.astype(jnp.bfloat16),
                 preferred_element_type=jnp.float32) + b2_ref[...]
    h2 = jnp.maximum(h2, 0.0).astype(jnp.bfloat16)

    # Hoisted edge-MLP first-layer matmuls: computed per NODE, not per edge.
    u_ref[...] = jnp.dot(h2, w3a_ref[...], preferred_element_type=jnp.float32)
    v_ref[...] = jnp.dot(h2, w3b_ref[...], preferred_element_type=jnp.float32)


# ----------------------------------------------------------------------------
# Kernel B: edge phase (SMEM scalar-prefetch gather + edge MLP), tiled grid.
# ----------------------------------------------------------------------------
def edge_phase_kernel(src_ref, dst_ref,              # scalar-prefetch (SMEM)
                      u_ref, v_ref, b3_ref, w4_ref, b4_ref,
                      out_ref, g_ref):
    te = out_ref.shape[0]
    base = pl.program_id(0) * te

    # Gather u[src] + v[dst] row-by-row from VMEM-resident node tensors.
    def gather(i, carry):
        s = src_ref[base + i]
        d = dst_ref[base + i]
        g_ref[pl.ds(i, 1), :] = u_ref[pl.ds(s, 1), :] + v_ref[pl.ds(d, 1), :]
        return carry

    lax.fori_loop(0, te, gather, 0)

    # e = relu(u[src] + v[dst] + b3) ; z = e @ W4 + b4  (lane-dense output)
    e_act = jnp.maximum(g_ref[...] + b3_ref[...], 0.0).astype(jnp.bfloat16)
    out_ref[...] = (jnp.dot(e_act, w4_ref[...],
                            preferred_element_type=jnp.float32)
                    + b4_ref[...])


# ----------------------------------------------------------------------------
# Plain-JAX glue: GCN normalization D^-1/2 (A + I_remaining) D^-1/2.
# ----------------------------------------------------------------------------
def gcn_norm_dense(edge_index, edge_weight, num_nodes):
    src = edge_index[0]
    dst = edge_index[1]
    if edge_weight is None:
        edge_weight = jnp.ones((src.shape[0],), dtype=jnp.float32)
    adj = jnp.zeros((num_nodes, num_nodes), jnp.float32)
    adj = adj.at[dst, src].add(edge_weight)            # A[dst, src] = w(src->dst)
    # add_remaining_self_loops: only add a weight-1 self loop where none exists
    diag = jnp.diagonal(adj)
    adj = adj + jnp.diag(jnp.where(diag > 0, 0.0, 1.0))
    deg = adj.sum(axis=1)                              # in-degree incl. self loop
    dinv = jnp.where(deg > 0, 1.0 / jnp.sqrt(deg), 0.0)
    return dinv[:, None] * adj * dinv[None, :]
    # TODO(synk): for large/static graphs, build A_norm once outside the hot
    # path or switch to a segment-sum message-passing formulation.


def init_params(key, in_channels, hidden_channels, edge_latent_dim):
    ks = jax.random.split(key, 6)
    scale = 0.1
    return {
        "w1": scale * jax.random.normal(ks[0], (in_channels, hidden_channels), jnp.float32),
        "b1": jnp.zeros((1, hidden_channels), jnp.float32),
        "w2": scale * jax.random.normal(ks[1], (hidden_channels, hidden_channels), jnp.float32),
        "b2": jnp.zeros((1, hidden_channels), jnp.float32),
        # edge_mlp Linear(2H -> H): [2H, H] weight split into src / dst halves
        "w3a": scale * jax.random.normal(ks[2], (hidden_channels, hidden_channels), jnp.float32),
        "w3b": scale * jax.random.normal(ks[3], (hidden_channels, hidden_channels), jnp.float32),
        "b3": scale * jax.random.normal(ks[4], (1, hidden_channels), jnp.float32),
        "w4": scale * jax.random.normal(ks[5], (hidden_channels, edge_latent_dim), jnp.float32),
        "b4": jnp.zeros((1, edge_latent_dim), jnp.float32),
    }


@functools.partial(jax.jit, static_argnames=("edge_latent_dim",))
def edge_encoder_forward(params, x, edge_index, edge_weight, edge_latent_dim):
    n, in_c = x.shape
    e = edge_index.shape[1]
    hid = params["w1"].shape[1]

    n_pad = _round_up(n, LANE)
    c_pad = _round_up(in_c, LANE)
    h_pad = _round_up(hid, LANE)
    l_pad = _round_up(edge_latent_dim, LANE)
    e_pad = _round_up(e, EDGE_TILE)
    n_tiles = e_pad // EDGE_TILE

    a_norm = gcn_norm_dense(edge_index, edge_weight, n)

    # Padded bf16 matmul operands (biases stay f32).
    a_p = _pad2(a_norm, n_pad, n_pad).astype(jnp.bfloat16)
    x_p = _pad2(x.astype(jnp.float32), n_pad, c_pad).astype(jnp.bfloat16)
    w1 = _pad2(params["w1"], c_pad, h_pad).astype(jnp.bfloat16)
    b1 = _pad2(params["b1"], 1, h_pad)
    w2 = _pad2(params["w2"], h_pad, h_pad).astype(jnp.bfloat16)
    b2 = _pad2(params["b2"], 1, h_pad)
    w3a = _pad2(params["w3a"], h_pad, h_pad).astype(jnp.bfloat16)
    w3b = _pad2(params["w3b"], h_pad, h_pad).astype(jnp.bfloat16)
    b3 = _pad2(params["b3"], 1, h_pad)
    w4 = _pad2(params["w4"], h_pad, l_pad).astype(jnp.bfloat16)
    b4 = _pad2(params["b4"], 1, l_pad)

    vmem = pl.BlockSpec(memory_space=pltpu.MemorySpace.VMEM)

    # ---------------- Kernel A: node phase ----------------
    u, v = pl.pallas_call(
        node_phase_kernel,
        out_shape=(jax.ShapeDtypeStruct((n_pad, h_pad), jnp.float32),
                   jax.ShapeDtypeStruct((n_pad, h_pad), jnp.float32)),
        in_specs=[vmem] * 8,
        out_specs=(vmem, vmem),
    )(a_p, x_p, w1, b1, w2, b2, w3a, w3b)

    # ---------------- Kernel B: edge phase ----------------
    src = jnp.pad(edge_index[0].astype(jnp.int32), (0, e_pad - e))
    dst = jnp.pad(edge_index[1].astype(jnp.int32), (0, e_pad - e))

    grid_spec = pltpu.PrefetchScalarGridSpec(
        num_scalar_prefetch=2,
        grid=(n_tiles,),
        in_specs=[
            pl.BlockSpec((n_pad, h_pad), lambda t, s, d: (0, 0)),   # u (resident)
            pl.BlockSpec((n_pad, h_pad), lambda t, s, d: (0, 0)),   # v (resident)
            pl.BlockSpec((1, h_pad),     lambda t, s, d: (0, 0)),   # b3
            pl.BlockSpec((h_pad, l_pad), lambda t, s, d: (0, 0)),   # w4
            pl.BlockSpec((1, l_pad),     lambda t, s, d: (0, 0)),   # b4
        ],
        out_specs=pl.BlockSpec((EDGE_TILE, l_pad), lambda t, s, d: (t, 0)),
        scratch_shapes=[pltpu.VMEM((EDGE_TILE, h_pad), jnp.float32)],
    )

    out_pad = pl.pallas_call(
        edge_phase_kernel,
        out_shape=jax.ShapeDtypeStruct((e_pad, l_pad), jnp.float32),
        grid_spec=grid_spec,
        compiler_params=pltpu.CompilerParams(
            dimension_semantics=("parallel",)),
    )(src, dst, u, v, b3, w4, b4)

    return out_pad[:e, :edge_latent_dim]


if __name__ == "__main__":
    # Small deterministic example consistent with the module:
    #   N=16 nodes, in_channels=8, hidden_channels=32, edge_latent_dim=16, E=24.
    N, IN_C, HID, LAT, E = 16, 8, 32, 16, 24

    key = jax.random.PRNGKey(0)
    k_x, k_src, k_dst, k_p = jax.random.split(key, 4)

    x = jax.random.normal(k_x, (N, IN_C), jnp.float32)
    src = jax.random.randint(k_src, (E,), 0, N, dtype=jnp.int32)
    dst = jax.random.randint(k_dst, (E,), 0, N, dtype=jnp.int32)
    edge_index = jnp.stack([src, dst], axis=0)          # [2, E]
    edge_weight = None                                  # same default as forward()

    params = init_params(k_p, IN_C, HID, LAT)

    z_uv = edge_encoder_forward(params, x, edge_index, edge_weight, LAT)
    z_uv = jax.block_until_ready(z_uv)

    assert z_uv.shape == (E, LAT), z_uv.shape
    assert jnp.all(jnp.isfinite(z_uv))
    print("KERNEL_OK")
</pallas_src>

<mosaic_0001>
module attributes {stable_mosaic.version = 11 : i64} {
  func.func private @main(%arg0: i32) attributes {dimension_semantics = [#tpu.dimension_semantics<core_parallel>], iteration_bounds = array<i64: 2>, tpu.core_type = #tpu.core_type<sc_scalar_subcore>, window_params = []} {
    return
  }
}

module attributes {stable_mosaic.version = 11 : i64} {
  func.func private @main(%arg0: i32) attributes {dimension_semantics = [#tpu.dimension_semantics<core_parallel>], iteration_bounds = array<i64: 2>, tpu.core_type = #tpu.core_type<sc_scalar_subcore>, window_params = []} {
    return
  }
}

module attributes {stable_mosaic.version = 11 : i64} {
  func.func @edge_phase_kernel(%arg0: i32, %arg1: memref<128xi32, #tpu.memory_space<smem>>, %arg2: memref<128xi32, #tpu.memory_space<smem>>, %arg3: memref<128x128xf32, #tpu.memory_space<vmem>>, %arg4: memref<128x128xf32, #tpu.memory_space<vmem>>, %arg5: memref<1x128xf32, #tpu.memory_space<vmem>>, %arg6: memref<128x128xbf16, #tpu.memory_space<vmem>>, %arg7: memref<1x128xf32, #tpu.memory_space<vmem>>, %arg8: memref<128x128xf32, #tpu.memory_space<vmem>>, %arg9: memref<128x128xf32, #tpu.memory_space<vmem>>) attributes {dimension_semantics = [#tpu.dimension_semantics<parallel>], iteration_bounds = array<i64: 1>, scalar_prefetch = 2 : i64, scratch_operands = 1 : i64, tpu.core_type = #tpu.core_type<tc>, window_params = [{pipeline_mode = #tpu.pipeline_mode<synchronous>, transform_indices = @transform_0, window_bounds = array<i64: 128, 128>}, {pipeline_mode = #tpu.pipeline_mode<synchronous>, transform_indices = @transform_1, window_bounds = array<i64: 128, 128>}, {pipeline_mode = #tpu.pipeline_mode<synchronous>, transform_indices = @transform_2, window_bounds = array<i64: 1, 128>}, {pipeline_mode = #tpu.pipeline_mode<synchronous>, transform_indices = @transform_3, window_bounds = array<i64: 128, 128>}, {pipeline_mode = #tpu.pipeline_mode<synchronous>, transform_indices = @transform_4, window_bounds = array<i64: 1, 128>}, {transform_indices = @transform_5, window_bounds = array<i64: 128, 128>}]} {
    %c128_i32 = arith.constant 128 : i32
    %0 = arith.muli %arg0, %c128_i32 : i32
    %c0_i32 = arith.constant 0 : i32
    %c128_i32_0 = arith.constant 128 : i32
    %1 = arith.addi %c0_i32, %c128_i32_0 : i32
    %c1_i32 = arith.constant 1 : i32
    scf.for %arg10 = %c0_i32 to %1 step %c1_i32  : i32 {
      %15 = arith.addi %0, %arg10 : i32
      %16 = arith.index_cast %15 : i32 to index
      %17 = memref.load %arg1[%16] : memref<128xi32, #tpu.memory_space<smem>>
      %18 = arith.addi %0, %arg10 : i32
      %19 = arith.index_cast %18 : i32 to index
      %20 = memref.load %arg2[%19] : memref<128xi32, #tpu.memory_space<smem>>
      %21 = arith.index_cast %17 : i32 to index
      %c0_12 = arith.constant 0 : index
      %22 = vector.load %arg3[%21, %c0_12] : memref<128x128xf32, #tpu.memory_space<vmem>>, vector<1x128xf32>
      %23 = arith.index_cast %20 : i32 to index
      %c0_13 = arith.constant 0 : index
      %24 = vector.load %arg4[%23, %c0_13] : memref<128x128xf32, #tpu.memory_space<vmem>>, vector<1x128xf32>
      %25 = arith.addf %22, %24 : vector<1x128xf32>
      %26 = arith.index_cast %arg10 : i32 to index
      %c0_14 = arith.constant 0 : index
      %27 = vector.load %arg9[%26, %c0_14] : memref<128x128xf32, #tpu.memory_space<vmem>>, vector<1x128xf32>
      tpu.vector_store %arg9[%26, %c0_14], %25 {strides = array<i32>} : memref<128x128xf32, #tpu.memory_space<vmem>>, vector<1x128xf32>,
    }
    %c128_i32_1 = arith.constant 128 : i32
    %c0 = arith.constant 0 : index
    %c0_2 = arith.constant 0 : index
    %2 = vector.load %arg9[%c0, %c0_2] : memref<128x128xf32, #tpu.memory_space<vmem>>, vector<128x128xf32>
    %c0_3 = arith.constant 0 : index
    %c0_4 = arith.constant 0 : index
    %3 = vector.load %arg5[%c0_3, %c0_4] : memref<1x128xf32, #tpu.memory_space<vmem>>, vector<1x128xf32>
    %4 = vector.broadcast %3 : vector<1x128xf32> to vector<128x128xf32>
    %5 = arith.addf %2, %4 : vector<128x128xf32>
    %cst = arith.constant 0.000000e+00 : f32
    %6 = vector.broadcast %cst : f32 to vector<128x128xf32>
    %7 = arith.maximumf %5, %6 : vector<128x128xf32>
    %8 = arith.truncf %7 : vector<128x128xf32> to vector<128x128xbf16>
    %c0_5 = arith.constant 0 : index
    %c0_6 = arith.constant 0 : index
    %9 = vector.load %arg6[%c0_5, %c0_6] : memref<128x128xbf16, #tpu.memory_space<vmem>>, vector<128x128xbf16>
    %cst_7 = arith.constant dense<0.000000e+00> : vector<128x128xf32>
    %10 = tpu.matmul %8, %9, %cst_7 {dimension_numbers = #tpu.dot_dimension_numbers<[1], [0], [0], [1], [0, 0, 1, 1], [], []>} : vector<128x128xbf16>, vector<128x128xbf16>, vector<128x128xf32> -> vector<128x128xf32>
    %c0_8 = arith.constant 0 : index
    %c0_9 = arith.constant 0 : index
    %11 = vector.load %arg7[%c0_8, %c0_9] : memref<1x128xf32, #tpu.memory_space<vmem>>, vector<1x128xf32>
    %12 = vector.broadcast %11 : vector<1x128xf32> to vector<128x128xf32>
    %13 = arith.addf %10, %12 : vector<128x128xf32>
    %c0_10 = arith.constant 0 : index
    %c0_11 = arith.constant 0 : index
    %14 = vector.load %arg8[%c0_10, %c0_11] : memref<128x128xf32, #tpu.memory_space<vmem>>, vector<128x128xf32>
    tpu.vector_store %arg8[%c0_10, %c0_11], %13 {strides = array<i32>} : memref<128x128xf32, #tpu.memory_space<vmem>>, vector<128x128xf32>,
    return
  }
  func.func @transform_0(%arg0: i32, %arg1: memref<128xi32, #tpu.memory_space<smem>>, %arg2: memref<128xi32, #tpu.memory_space<smem>>) -> (i32, i32) {
    %c0_i32 = arith.constant 0 : i32
    %c0_i32_0 = arith.constant 0 : i32
    %c0_i32_1 = arith.constant 0 : i32
    return %c0_i32, %c0_i32_0 : i32, i32
  }
  func.func @transform_1(%arg0: i32, %arg1: memref<128xi32, #tpu.memory_space<smem>>, %arg2: memref<128xi32, #tpu.memory_space<smem>>) -> (i32, i32) {
    %c0_i32 = arith.constant 0 : i32
    %c0_i32_0 = arith.constant 0 : i32
    %c0_i32_1 = arith.constant 0 : i32
    return %c0_i32, %c0_i32_0 : i32, i32
  }
  func.func @transform_2(%arg0: i32, %arg1: memref<128xi32, #tpu.memory_space<smem>>, %arg2: memref<128xi32, #tpu.memory_space<smem>>) -> (i32, i32) {
    %c0_i32 = arith.constant 0 : i32
    %c0_i32_0 = arith.constant 0 : i32
    %c0_i32_1 = arith.constant 0 : i32
    return %c0_i32, %c0_i32_0 : i32, i32
  }
  func.func @transform_3(%arg0: i32, %arg1: memref<128xi32, #tpu.memory_space<smem>>, %arg2: memref<128xi32, #tpu.memory_space<smem>>) -> (i32, i32) {
    %c0_i32 = arith.constant 0 : i32
    %c0_i32_0 = arith.constant 0 : i32
    %c0_i32_1 = arith.constant 0 : i32
    return %c0_i32, %c0_i32_0 : i32, i32
  }
  func.func @transform_4(%arg0: i32, %arg1: memref<128xi32, #tpu.memory_space<smem>>, %arg2: memref<128xi32, #tpu.memory_space<smem>>) -> (i32, i32) {
    %c0_i32 = arith.constant 0 : i32
    %c0_i32_0 = arith.constant 0 : i32
    %c0_i32_1 = arith.constant 0 : i32
    return %c0_i32, %c0_i32_0 : i32, i32
  }
  func.func @transform_5(%arg0: i32, %arg1: memref<128xi32, #tpu.memory_space<smem>>, %arg2: memref<128xi32, #tpu.memory_space<smem>>) -> (i32, i32) {
    %c0_i32 = arith.constant 0 : i32
    %c0_i32_0 = arith.constant 0 : i32
    return %arg0, %c0_i32 : i32, i32
  }
}

module attributes {stable_mosaic.version = 11 : i64} {
  func.func @node_phase_kernel(%arg0: memref<128x128xbf16, #tpu.memory_space<vmem>>, %arg1: memref<128x128xbf16, #tpu.memory_space<vmem>>, %arg2: memref<128x128xbf16, #tpu.memory_space<vmem>>, %arg3: memref<1x128xf32, #tpu.memory_space<vmem>>, %arg4: memref<128x128xbf16, #tpu.memory_space<vmem>>, %arg5: memref<1x128xf32, #tpu.memory_space<vmem>>, %arg6: memref<128x128xbf16, #tpu.memory_space<vmem>>, %arg7: memref<128x128xbf16, #tpu.memory_space<vmem>>, %arg8: memref<128x128xf32, #tpu.memory_space<vmem>>, %arg9: memref<128x128xf32, #tpu.memory_space<vmem>>) attributes {dimension_semantics = [], scalar_prefetch = 0 : i64, scratch_operands = 0 : i64, tpu.core_type = #tpu.core_type<tc>} {
    %c0 = arith.constant 0 : index
    %c0_0 = arith.constant 0 : index
    %0 = vector.load %arg0[%c0, %c0_0] : memref<128x128xbf16, #tpu.memory_space<vmem>>, vector<128x128xbf16>
    %c0_1 = arith.constant 0 : index
    %c0_2 = arith.constant 0 : index
    %1 = vector.load %arg1[%c0_1, %c0_2] : memref<128x128xbf16, #tpu.memory_space<vmem>>, vector<128x128xbf16>
    %c0_3 = arith.constant 0 : index
    %c0_4 = arith.constant 0 : index
    %2 = vector.load %arg2[%c0_3, %c0_4] : memref<128x128xbf16, #tpu.memory_space<vmem>>, vector<128x128xbf16>
    %cst = arith.constant dense<0.000000e+00> : vector<128x128xf32>
    %3 = tpu.matmul %1, %2, %cst {dimension_numbers = #tpu.dot_dimension_numbers<[1], [0], [0], [1], [0, 0, 1, 1], [], []>} : vector<128x128xbf16>, vector<128x128xbf16>, vector<128x128xf32> -> vector<128x128xf32>
    %4 = arith.truncf %3 : vector<128x128xf32> to vector<128x128xbf16>
    %cst_5 = arith.constant dense<0.000000e+00> : vector<128x128xf32>
    %5 = tpu.matmul %0, %4, %cst_5 {dimension_numbers = #tpu.dot_dimension_numbers<[1], [0], [0], [1], [0, 0, 1, 1], [], []>} : vector<128x128xbf16>, vector<128x128xbf16>, vector<128x128xf32> -> vector<128x128xf32>
    %c0_6 = arith.constant 0 : index
    %c0_7 = arith.constant 0 : index
    %6 = vector.load %arg3[%c0_6, %c0_7] : memref<1x128xf32, #tpu.memory_space<vmem>>, vector<1x128xf32>
    %7 = vector.broadcast %6 : vector<1x128xf32> to vector<128x128xf32>
    %8 = arith.addf %5, %7 : vector<128x128xf32>
    %cst_8 = arith.constant 0.000000e+00 : f32
    %9 = vector.broadcast %cst_8 : f32 to vector<128x128xf32>
    %10 = arith.maximumf %8, %9 : vector<128x128xf32>
    %11 = arith.truncf %10 : vector<128x128xf32> to vector<128x128xbf16>
    %c0_9 = arith.constant 0 : index
    %c0_10 = arith.constant 0 : index
    %12 = vector.load %arg4[%c0_9, %c0_10] : memref<128x128xbf16, #tpu.memory_space<vmem>>, vector<128x128xbf16>
    %cst_11 = arith.constant dense<0.000000e+00> : vector<128x128xf32>
    %13 = tpu.matmul %11, %12, %cst_11 {dimension_numbers = #tpu.dot_dimension_numbers<[1], [0], [0], [1], [0, 0, 1, 1], [], []>} : vector<128x128xbf16>, vector<128x128xbf16>, vector<128x128xf32> -> vector<128x128xf32>
    %14 = arith.truncf %13 : vector<128x128xf32> to vector<128x128xbf16>
    %cst_12 = arith.constant dense<0.000000e+00> : vector<128x128xf32>
    %15 = tpu.matmul %0, %14, %cst_12 {dimension_numbers = #tpu.dot_dimension_numbers<[1], [0], [0], [1], [0, 0, 1, 1], [], []>} : vector<128x128xbf16>, vector<128x128xbf16>, vector<128x128xf32> -> vector<128x128xf32>
    %c0_13 = arith.constant 0 : index
    %c0_14 = arith.constant 0 : index
    %16 = vector.load %arg5[%c0_13, %c0_14] : memref<1x128xf32, #tpu.memory_space<vmem>>, vector<1x128xf32>
    %17 = vector.broadcast %16 : vector<1x128xf32> to vector<128x128xf32>
    %18 = arith.addf %15, %17 : vector<128x128xf32>
    %cst_15 = arith.constant 0.000000e+00 : f32
    %19 = vector.broadcast %cst_15 : f32 to vector<128x128xf32>
    %20 = arith.maximumf %18, %19 : vector<128x128xf32>
    %21 = arith.truncf %20 : vector<128x128xf32> to vector<128x128xbf16>
    %c0_16 = arith.constant 0 : index
    %c0_17 = arith.constant 0 : index
    %22 = vector.load %arg6[%c0_16, %c0_17] : memref<128x128xbf16, #tpu.memory_space<vmem>>, vector<128x128xbf16>
    %cst_18 = arith.constant dense<0.000000e+00> : vector<128x128xf32>
    %23 = tpu.matmul %21, %22, %cst_18 {dimension_numbers = #tpu.dot_dimension_numbers<[1], [0], [0], [1], [0, 0, 1, 1], [], []>} : vector<128x128xbf16>, vector<128x128xbf16>, vector<128x128xf32> -> vector<128x128xf32>
    %c0_19 = arith.constant 0 : index
    %c0_20 = arith.constant 0 : index
    %24 = vector.load %arg8[%c0_19, %c0_20] : memref<128x128xf32, #tpu.memory_space<vmem>>, vector<128x128xf32>
    tpu.vector_store %arg8[%c0_19, %c0_20], %23 {strides = array<i32>} : memref<128x128xf32, #tpu.memory_space<vmem>>, vector<128x128xf32>,
    %c0_21 = arith.constant 0 : index
    %c0_22 = arith.constant 0 : index
    %25 = vector.load %arg7[%c0_21, %c0_22] : memref<128x128xbf16, #tpu.memory_space<vmem>>, vector<128x128xbf16>
    %cst_23 = arith.constant dense<0.000000e+00> : vector<128x128xf32>
    %26 = tpu.matmul %21, %25, %cst_23 {dimension_numbers = #tpu.dot_dimension_numbers<[1], [0], [0], [1], [0, 0, 1, 1], [], []>} : vector<128x128xbf16>, vector<128x128xbf16>, vector<128x128xf32> -> vector<128x128xf32>
    %c0_24 = arith.constant 0 : index
    %c0_25 = arith.constant 0 : index
    %27 = vector.load %arg9[%c0_24, %c0_25] : memref<128x128xf32, #tpu.memory_space<vmem>>, vector<128x128xf32>
    tpu.vector_store %arg9[%c0_24, %c0_25], %26 {strides = array<i32>} : memref<128x128xf32, #tpu.memory_space<vmem>>, vector<128x128xf32>,
    return
  }
}

</mosaic_0001>

<llo_original>
// kernel: edge_encoder_forward.3
$region0: #{edge_encoder_forward.3}
  #allocation0 [shape = 'u32[]', space=smem, size = 0x4, offset = 0x4, fixed_abs, tag = 'smem constant byte address 0x4 - core index']
  #allocation1 [shape = 'u32[144,128]{1,0:T(1,128)}', space=vmem, size = 0x12000, scoped, tag = 'internal scratch']
  #allocation2 [shape = 'f32[128,128]{1,0:T(8,128)}', space=vmem, size = 0x10000, scoped, tag = 'scratch operand']
  #allocation3 [shape = 's32[1]{0}', space=sflag, size = 0x4, scoped, tag = 'scoped memory for edge_encoder_forward.3']
  #allocation4 [shape = 'u8[512]{0}', space=smem, size = 0x200, scoped, tag = 'prefetched SMEM operand 0']
  #allocation5 [shape = 'u8[512]{0}', space=smem, size = 0x200, scoped, tag = 'prefetched SMEM operand 1']
  %s0 = inlined_call_operand.vmem [shape: s32[128], index: 0, kind: input, shape index: {}]
  %s1 = inlined_call_operand.vmem [shape: s32[128], index: 1, kind: input, shape index: {}]
  %s2 = inlined_call_operand.vmem [shape: f32[128,128], index: 2, kind: input, shape index: {}]
  %s3 = inlined_call_operand.vmem [shape: f32[128,128], index: 3, kind: input, shape index: {}]
  %s4 = inlined_call_operand.vmem [shape: f32[1,128], index: 4, kind: input, shape index: {}]
  %s5 = inlined_call_operand.vmem [shape: bf16[128,128], index: 5, kind: input, shape index: {}]
  %s6 = inlined_call_operand.vmem [shape: f32[1,128], index: 6, kind: input, shape index: {}]
  %s7 = inlined_call_operand.vmem [shape: f32[128,128], index: 7, kind: output, shape index: {}]
  %s8 = sld [smem:[#allocation0]]
  $region37: #{edge_encoder_forward.3} parent=0
    _
  %s10 = ssub.s32 1, %s8
  %s11 = scalar_select 0, %s10, %s8
  %s12 = sshll.u32 %s0, 4
  %s13 = int_to_ptr.vmem [resolvable:$true] %s12
  %15 = dma.vmem_to_smem %s13, 16, [#allocation4], [#allocation3]
  %s16 = sshll.u32 %s1, 4
  %s17 = int_to_ptr.vmem [resolvable:$true] %s16
  %19 = dma.vmem_to_smem %s17, 16, [#allocation5], [#allocation3]
  %20 = dma.done [#allocation3], 32
  %21 = sfence
  // Predicated region
  $region2: #{edge_encoder_forward.3} parent=0 // pred_check
    _
  $region3: #{edge_encoder_forward.3} parent=0 // pred_check_branch
    %23 = sbr.rel (0) target = $region5
  $region4: #{edge_encoder_forward.3} parent=0 // pred_region
    _
  $region5: #{edge_encoder_forward.3} parent=0 // pred_fallthru
    _
  // Predicated region
  $region6: #{edge_encoder_forward.3} parent=0 // pred_check
    _
  $region7: #{edge_encoder_forward.3} parent=0 // pred_check_branch
    %25 = sbr.rel (0) target = $region9
  $region8: #{edge_encoder_forward.3} parent=0 // pred_region
    _
  $region9: #{edge_encoder_forward.3} parent=0 // pred_fallthru
    _
  // Predicated region
  $region10: #{edge_encoder_forward.3} parent=0 // pred_check
    _
  $region11: #{edge_encoder_forward.3} parent=0 // pred_check_branch
    %27 = sbr.rel (0) target = $region13
  $region12: #{edge_encoder_forward.3} parent=0 // pred_region
    _
  $region13: #{edge_encoder_forward.3} parent=0 // pred_fallthru
    _
  // Predicated region
  $region14: #{edge_encoder_forward.3} parent=0 // pred_check
    _
  $region15: #{edge_encoder_forward.3} parent=0 // pred_check_branch
    %29 = sbr.rel (0) target = $region17
  $region16: #{edge_encoder_forward.3} parent=0 // pred_region
    _
  $region17: #{edge_encoder_forward.3} parent=0 // pred_fallthru
    _
  // Predicated region
  $region18: #{edge_encoder_forward.3} parent=0 // pred_check
    _
  $region19: #{edge_encoder_forward.3} parent=0 // pred_check_branch
    %31 = sbr.rel (0) target = $region21
  $region20: #{edge_encoder_forward.3} parent=0 // pred_region
    _
  $region21: #{edge_encoder_forward.3} parent=0 // pred_fallthru
    _
  %s33 = smul.u32 0, 128
  loop: start=0, step=1, limit=128
  $region22: #{edge_encoder_forward.3} parent=0 // loop_pre_header
    _
  $region23: #{edge_encoder_forward.3} parent=0 // loop_header
    %s35 = sphi 0, %s39
    %p36 = scmp.ge.s32.totalorder %s35, 128
  $region24: #{edge_encoder_forward.3} parent=0 // loop_header_branch
    %38 = sbr.rel (%p36) target = $region28
  $region25: #{edge_encoder_forward.3} parent=0 // loop_body
    %s40 = sadd.s32 %s33, %s35
    %s41 = sld [smem:[#allocation4 + %s40]]
    %s42 = sld [smem:[#allocation5 + %s40]]
    %s43 = scalar_lea.vmem %s2, %s41
    %v44 = vld [vmem:[%s43] sm:$0x1]
    %s45 = scalar_lea.vmem %s3, %s42
    %v46 = vld [vmem:[%s45] sm:$0x1]
    %v47 = vadd.f32 %v44, %v46
    %s48 = scalar_lea.vmem [#allocation2], %s35
    %49 = vst [vmem:[%s48] sm:$0x1] %v47
  $region26: #{edge_encoder_forward.3} parent=0 // loop_footer
    %s39 = sadd.s32 1, %s35
  $region27: #{edge_encoder_forward.3} parent=0 // loop_footer_branch
    %34 = sbr.rel target = $region23
  $region28: #{edge_encoder_forward.3} parent=0 // loop_exit
    _
  %v50 = vld [vmem:[#allocation2] sm:$0xff]
  %v51 = vld [vmem:[#allocation2 + $0x8] sm:$0xff]
  %v52 = vld [vmem:[#allocation2 + $0x10] sm:$0xff]
  %v53 = vld [vmem:[#allocation2 + $0x18] sm:$0xff]
  %v54 = vld [vmem:[#allocation2 + $0x20] sm:$0xff]
  %v55 = vld [vmem:[#allocation2 + $0x28] sm:$0xff]
  %v56 = vld [vmem:[#allocation2 + $0x30] sm:$0xff]
  %v57 = vld [vmem:[#allocation2 + $0x38] sm:$0xff]
  %v58 = vld [vmem:[#allocation2 + $0x40] sm:$0xff]
  %v59 = vld [vmem:[#allocation2 + $0x48] sm:$0xff]
  %v60 = vld [vmem:[#allocation2 + $0x50] sm:$0xff]
  %v61 = vld [vmem:[#allocation2 + $0x58] sm:$0xff]
  %v62 = vld [vmem:[#allocation2 + $0x60] sm:$0xff]
  %v63 = vld [vmem:[#allocation2 + $0x68] sm:$0xff]
  %v64 = vld [vmem:[#allocation2 + $0x70] sm:$0xff]
  %v65 = vld [vmem:[#allocation2 + $0x78] sm:$0xff]
  %v66 = vld [vmem:[%s4] sm:$0x1]
  %v68 = vlaneseq
  %v69 = vshrl.u32 %v68, 7
  %v70 = vsub.s32 0, %v69
  %v71 = vrot.slane %v66, %v70
  %v73 = vadd.f32 %v50, %v71
  %v74 = vadd.f32 %v51, %v71
  %v75 = vadd.f32 %v52, %v71
  %v76 = vadd.f32 %v53, %v71
  %v77 = vadd.f32 %v54, %v71
  %v78 = vadd.f32 %v55, %v71
  %v79 = vadd.f32 %v56, %v71
  %v80 = vadd.f32 %v57, %v71
  %v81 = vadd.f32 %v58, %v71
  %v82 = vadd.f32 %v59, %v71
  %v83 = vadd.f32 %v60, %v71
  %v84 = vadd.f32 %v61, %v71
  %v85 = vadd.f32 %v62, %v71
  %v86 = vadd.f32 %v63, %v71
  %v87 = vadd.f32 %v64, %v71
  %v88 = vadd.f32 %v65, %v71
  %v89 = vmax.f32 %v73, 0.0
  %v90 = vmax.f32 %v74, 0.0
  %v91 = vmax.f32 %v75, 0.0
  %v92 = vmax.f32 %v76, 0.0
  %v93 = vmax.f32 %v77, 0.0
  %v94 = vmax.f32 %v78, 0.0
  %v95 = vmax.f32 %v79, 0.0
  %v96 = vmax.f32 %v80, 0.0
  %v97 = vmax.f32 %v81, 0.0
  %v98 = vmax.f32 %v82, 0.0
  %v99 = vmax.f32 %v83, 0.0
  %v100 = vmax.f32 %v84, 0.0
  %v101 = vmax.f32 %v85, 0.0
  %v102 = vmax.f32 %v86, 0.0
  %v103 = vmax.f32 %v87, 0.0
  %v104 = vmax.f32 %v88, 0.0
  %v105 = vpack.c.bf16 %v90, %v89
  %v106 = vpack.c.bf16 %v92, %v91
  %v107 = vpack.c.bf16 %v94, %v93
  %v108 = vpack.c.bf16 %v96, %v95
  %v109 = vpack.c.bf16 %v98, %v97
  %v110 = vpack.c.bf16 %v100, %v99
  %v111 = vpack.c.bf16 %v102, %v101
  %v112 = vpack.c.bf16 %v104, %v103
  %v113 = vld [vmem:[%s5] sm:$0xf]
  %v114 = vld [vmem:[%s5 + $0x4] sm:$0xf]
  %v115 = vld [vmem:[%s5 + $0x8] sm:$0xf]
  %v116 = vld [vmem:[%s5 + $0xc] sm:$0xf]
  %v117 = vld [vmem:[%s5 + $0x10] sm:$0xf]
  %v118 = vld [vmem:[%s5 + $0x14] sm:$0xf]
  %v119 = vld [vmem:[%s5 + $0x18] sm:$0xf]
  %v120 = vld [vmem:[%s5 + $0x1c] sm:$0xf]
  %v121 = vld [vmem:[%s5 + $0x20] sm:$0xf]
  %v122 = vld [vmem:[%s5 + $0x24] sm:$0xf]
  %v123 = vld [vmem:[%s5 + $0x28] sm:$0xf]
  %v124 = vld [vmem:[%s5 + $0x2c] sm:$0xf]
  %v125 = vld [vmem:[%s5 + $0x30] sm:$0xf]
  %v126 = vld [vmem:[%s5 + $0x34] sm:$0xf]
  %v127 = vld [vmem:[%s5 + $0x38] sm:$0xf]
  %v128 = vld [vmem:[%s5 + $0x3c] sm:$0xf]
  %v129 = vld [vmem:[%s6] sm:$0x1]
  %v131 = vlaneseq
  %v132 = vshrl.u32 %v131, 7
  %v133 = vsub.s32 0, %v132
  %v134 = vrot.slane %v129, %v133
  %v152 = vunpack.c.l.b16 %v113
  %v153 = vunpack.c.l.b16 %v114
  %v154 = vunpack.c.l.b16 %v115
  %v155 = vunpack.c.l.b16 %v116
  %v156 = vunpack.c.l.b16 %v117
  %v157 = vunpack.c.l.b16 %v118
  %v158 = vunpack.c.l.b16 %v119
  %v159 = vunpack.c.l.b16 %v120
  %v160 = vunpack.c.l.b16 %v121
  %v161 = vunpack.c.l.b16 %v122
  %v162 = vunpack.c.l.b16 %v123
  %v163 = vunpack.c.l.b16 %v124
  %v164 = vunpack.c.l.b16 %v125
  %v165 = vunpack.c.l.b16 %v126
  %v166 = vunpack.c.l.b16 %v127
  %v167 = vunpack.c.l.b16 %v128
  %v168 = vpack.c.b16 %v153, %v152
  %v169 = vpack.c.b16 %v155, %v154
  %v170 = vpack.c.b16 %v157, %v156
  %v171 = vpack.c.b16 %v159, %v158
  %v172 = vpack.c.b16 %v161, %v160
  %v173 = vpack.c.b16 %v163, %v162
  %v174 = vpack.c.b16 %v165, %v164
  %v175 = vpack.c.b16 %v167, %v166
  %184 = vmatprep.subr.bf16.mxu0 0
  %185 = vmatpush1.bf16.msra.mxu0 %v175
  %186 = vmatprep.subr.bf16.mxu0 0
  %187 = vmatpush1.bf16.msra.mxu0 %v174
  %188 = vmatprep.subr.bf16.mxu0 0
  %189 = vmatpush1.bf16.msra.mxu0 %v173
  %190 = vmatprep.subr.bf16.mxu0 0
  %191 = vmatpush1.bf16.msra.mxu0 %v172
  %192 = vmatprep.subr.bf16.mxu0 0
  %193 = vmatpush1.bf16.msra.mxu0 %v171
  %194 = vmatprep.subr.bf16.mxu0 0
  %195 = vmatpush1.bf16.msra.mxu0 %v170
  %196 = vmatprep.subr.bf16.mxu0 0
  %197 = vmatpush1.bf16.msra.mxu0 %v169
  %198 = vmatprep.subr.bf16.mxu0 0
  %199 = vmatpush1.bf16.msra.mxu0 %v168
  %200 = vmatprep.subr.bf16.mxu0 0
  %201 = vmatpush2.bf16.msra.mxu0 0
  %202 = vmatprep.subr.bf16.mxu0 0
  %203 = vmatpush2.bf16.msra.mxu0 0
  %204 = vmatprep.subr.bf16.mxu0 0
  %205 = vmatpush2.bf16.msra.mxu0 0
  %206 = vmatprep.subr.bf16.mxu0 0
  %207 = vmatpush2.bf16.msra.mxu0 0
  %208 = vmatprep.subr.bf16.mxu0 0
  %209 = vmatpush2.bf16.msra.mxu0 0
  %210 = vmatprep.subr.bf16.mxu0 0
  %211 = vmatpush2.bf16.msra.mxu0 0
  %212 = vmatprep.subr.bf16.mxu0 0
  %213 = vmatpush2.bf16.msra.mxu0 0
  %214 = vmatprep.subr.bf16.mxu0 0
  %215 = vmatpush2.bf16.msra.mxu0 0
  %216 = vmatprep.mubr.bf16.mxu0 0
  %217 = vmatmul.mubr.bf16.gmra.mxu0 %v105
  %v218 = vpop.f32.mrf.mxu0
  %v219 = vadd.f32 %v134, %v218
  %v220 = vpop.f32.mrf.mxu0
  %v221 = vpop.f32.mrf.mxu0
  %v222 = vadd.f32 %v134, %v221
  %v223 = vpop.f32.mrf.mxu0
  %224 = vmatprep.mubr.bf16.mxu0 0
  %225 = vmatmul.mubr.bf16.gmra.mxu0 %v106
  %v226 = vpop.f32.mrf.mxu0
  %v227 = vadd.f32 %v134, %v226
  %v228 = vpop.f32.mrf.mxu0
  %v229 = vpop.f32.mrf.mxu0
  %v230 = vadd.f32 %v134, %v229
  %v231 = vpop.f32.mrf.mxu0
  %232 = vmatprep.mubr.bf16.mxu0 0
  %233 = vmatmul.mubr.bf16.gmra.mxu0 %v107
  %v234 = vpop.f32.mrf.mxu0
  %v235 = vadd.f32 %v134, %v234
  %v236 = vpop.f32.mrf.mxu0
  %v237 = vpop.f32.mrf.mxu0
  %v238 = vadd.f32 %v134, %v237
  %v239 = vpop.f32.mrf.mxu0
  %240 = vmatprep.mubr.bf16.mxu0 0
  %241 = vmatmul.mubr.bf16.gmra.mxu0 %v108
  %v242 = vpop.f32.mrf.mxu0
  %v243 = vadd.f32 %v134, %v242
  %v244 = vpop.f32.mrf.mxu0
  %v245 = vpop.f32.mrf.mxu0
  %v246 = vadd.f32 %v134, %v245
  %v247 = vpop.f32.mrf.mxu0
  %248 = vmatprep.mubr.bf16.mxu0 0
  %249 = vmatmul.mubr.bf16.gmra.mxu0 %v109
  %v250 = vpop.f32.mrf.mxu0
  %v251 = vadd.f32 %v134, %v250
  %v252 = vpop.f32.mrf.mxu0
  %v253 = vpop.f32.mrf.mxu0
  %v254 = vadd.f32 %v134, %v253
  %v255 = vpop.f32.mrf.mxu0
  %256 = vmatprep.mubr.bf16.mxu0 0
  %257 = vmatmul.mubr.bf16.gmra.mxu0 %v110
  %v258 = vpop.f32.mrf.mxu0
  %v259 = vadd.f32 %v134, %v258
  %v260 = vpop.f32.mrf.mxu0
  %v261 = vpop.f32.mrf.mxu0
  %v262 = vadd.f32 %v134, %v261
  %v263 = vpop.f32.mrf.mxu0
  %264 = vmatprep.mubr.bf16.mxu0 0
  %265 = vmatmul.mubr.bf16.gmra.mxu0 %v111
  %v266 = vpop.f32.mrf.mxu0
  %v267 = vadd.f32 %v134, %v266
  %v268 = vpop.f32.mrf.mxu0
  %v269 = vpop.f32.mrf.mxu0
  %v270 = vadd.f32 %v134, %v269
  %v271 = vpop.f32.mrf.mxu0
  %272 = vmatprep.mubr.bf16.mxu0 0
  %273 = vmatmul.mubr.bf16.gmra.mxu0 %v112
  %v274 = vpop.f32.mrf.mxu0
  %v275 = vadd.f32 %v134, %v274
  %v276 = vpop.f32.mrf.mxu0
  %v277 = vpop.f32.mrf.mxu0
  %v278 = vadd.f32 %v134, %v277
  %v279 = vpop.f32.mrf.mxu0
  %280 = vdwg.mxu0
  %281 = vst [vmem:[%s7] sm:$0xff] %v219
  %282 = vst [vmem:[%s7 + $0x8] sm:$0xff] %v222
  %283 = vst [vmem:[%s7 + $0x10] sm:$0xff] %v227
  %284 = vst [vmem:[%s7 + $0x18] sm:$0xff] %v230
  %285 = vst [vmem:[%s7 + $0x20] sm:$0xff] %v235
  %286 = vst [vmem:[%s7 + $0x28] sm:$0xff] %v238
  %287 = vst [vmem:[%s7 + $0x30] sm:$0xff] %v243
  %288 = vst [vmem:[%s7 + $0x38] sm:$0xff] %v246
  %289 = vst [vmem:[%s7 + $0x40] sm:$0xff] %v251
  %290 = vst [vmem:[%s7 + $0x48] sm:$0xff] %v254
  %291 = vst [vmem:[%s7 + $0x50] sm:$0xff] %v259
  %292 = vst [vmem:[%s7 + $0x58] sm:$0xff] %v262
  %293 = vst [vmem:[%s7 + $0x60] sm:$0xff] %v267
  %294 = vst [vmem:[%s7 + $0x68] sm:$0xff] %v270
  %295 = vst [vmem:[%s7 + $0x70] sm:$0xff] %v275
  %296 = vst [vmem:[%s7 + $0x78] sm:$0xff] %v278
  // Predicated region
  $region29: #{edge_encoder_forward.3} parent=0 // pred_check
    _
  $region30: #{edge_encoder_forward.3} parent=0 // pred_check_branch
    %298 = sbr.rel (0) target = $region32
  $region31: #{edge_encoder_forward.3} parent=0 // pred_region
    _
  $region32: #{edge_encoder_forward.3} parent=0 // pred_fallthru
    _
  // Predicated region
  $region33: #{edge_encoder_forward.3} parent=0 // pred_check
    _
  $region34: #{edge_encoder_forward.3} parent=0 // pred_check_branch
    %300 = sbr.rel (0) target = $region36
  $region35: #{edge_encoder_forward.3} parent=0 // pred_region
    _
  $region36: #{edge_encoder_forward.3} parent=0 // pred_fallthru
    _

// kernel: edge_encoder_forward.2
$region0: #{edge_encoder_forward.2}
  #allocation0 [shape = 'u32[]', space=smem, size = 0x4, offset = 0x4, fixed_abs, tag = 'smem constant byte address 0x4 - core index']
  #allocation1 [shape = 'u32[144,128]{1,0:T(1,128)}', space=vmem, size = 0x12000, scoped, tag = 'internal scratch']
  %s0 = inlined_call_operand.vmem [shape: bf16[128,128], index: 0, kind: input, shape index: {}]
  %s1 = inlined_call_operand.vmem [shape: bf16[128,128], index: 1, kind: input, shape index: {}]
  %s2 = inlined_call_operand.vmem [shape: bf16[128,128], index: 2, kind: input, shape index: {}]
  %s3 = inlined_call_operand.vmem [shape: f32[1,128], index: 3, kind: input, shape index: {}]
  %s4 = inlined_call_operand.vmem [shape: bf16[128,128], index: 4, kind: input, shape index: {}]
  %s5 = inlined_call_operand.vmem [shape: f32[1,128], index: 5, kind: input, shape index: {}]
  %s6 = inlined_call_operand.vmem [shape: bf16[128,128], index: 6, kind: input, shape index: {}]
  %s7 = inlined_call_operand.vmem [shape: bf16[128,128], index: 7, kind: input, shape index: {}]
  %s8 = inlined_call_operand.vmem [shape: f32[128,128], index: 8, kind: output, shape index: {0}]
  %s9 = inlined_call_operand.vmem [shape: f32[128,128], index: 9, kind: output, shape index: {1}]
  %10 = xla_tuple %s8, %s9
  %s11 = sld [smem:[#allocation0]]
  $region50: #{edge_encoder_forward.2} parent=0
    _
  %s13 = ssub.s32 1, %s11
  %s14 = scalar_select 0, %s13, %s11
  // Predicated region
  $region2: #{edge_encoder_forward.2} parent=0 // pred_check
    _
  $region3: #{edge_encoder_forward.2} parent=0 // pred_check_branch
    %16 = sbr.rel (0) target = $region5
  $region4: #{edge_encoder_forward.2} parent=0 // pred_region
    _
  $region5: #{edge_encoder_forward.2} parent=0 // pred_fallthru
    _
  // Predicated region
  $region6: #{edge_encoder_forward.2} parent=0 // pred_check
    _
  $region7: #{edge_encoder_forward.2} parent=0 // pred_check_branch
    %18 = sbr.rel (0) target = $region9
  $region8: #{edge_encoder_forward.2} parent=0 // pred_region
    _
  $region9: #{edge_encoder_forward.2} parent=0 // pred_fallthru
    _
  // Predicated region
  $region10: #{edge_encoder_forward.2} parent=0 // pred_check
    _
  $region11: #{edge_encoder_forward.2} parent=0 // pred_check_branch
    %20 = sbr.rel (0) target = $region13
  $region12: #{edge_encoder_forward.2} parent=0 // pred_region
    _
  $region13: #{edge_encoder_forward.2} parent=0 // pred_fallthru
    _
  // Predicated region
  $region14: #{edge_encoder_forward.2} parent=0 // pred_check
    _
  $region15: #{edge_encoder_forward.2} parent=0 // pred_check_branch
    %22 = sbr.rel (0) target = $region17
  $region16: #{edge_encoder_forward.2} parent=0 // pred_region
    _
  $region17: #{edge_encoder_forward.2} parent=0 // pred_fallthru
    _
  // Predicated region
  $region18: #{edge_encoder_forward.2} parent=0 // pred_check
    _
  $region19: #{edge_encoder_forward.2} parent=0 // pred_check_branch
    %24 = sbr.rel (0) target = $region21
  $region20: #{edge_encoder_forward.2} parent=0 // pred_region
    _
  $region21: #{edge_encoder_forward.2} parent=0 // pred_fallthru
    _
  // Predicated region
  $region22: #{edge_encoder_forward.2} parent=0 // pred_check
    _
  $region23: #{edge_encoder_forward.2} parent=0 // pred_check_branch
    %26 = sbr.rel (0) target = $region25
  $region24: #{edge_encoder_forward.2} parent=0 // pred_region
    _
  $region25: #{edge_encoder_forward.2} parent=0 // pred_fallthru
    _
  // Predicated region
  $region26: #{edge_encoder_forward.2} parent=0 // pred_check
    _
  $region27: #{edge_encoder_forward.2} parent=0 // pred_check_branch
    %28 = sbr.rel (0) target = $region29
  $region28: #{edge_encoder_forward.2} parent=0 // pred_region
    _
  $region29: #{edge_encoder_forward.2} parent=0 // pred_fallthru
    _
  // Predicated region
  $region30: #{edge_encoder_forward.2} parent=0 // pred_check
    _
  $region31: #{edge_encoder_forward.2} parent=0 // pred_check_branch
    %30 = sbr.rel (0) target = $region33
  $region32: #{edge_encoder_forward.2} parent=0 // pred_region
    _
  $region33: #{edge_encoder_forward.2} parent=0 // pred_fallthru
    _
  %v32 = vld [vmem:[%s0] sm:$0xf]
  %v33 = vld [vmem:[%s0 + $0x4] sm:$0xf]
  %v34 = vld [vmem:[%s0 + $0x8] sm:$0xf]
  %v35 = vld [vmem:[%s0 + $0xc] sm:$0xf]
  %v36 = vld [vmem:[%s0 + $0x10] sm:$0xf]
  %v37 = vld [vmem:[%s0 + $0x14] sm:$0xf]
  %v38 = vld [vmem:[%s0 + $0x18] sm:$0xf]
  %v39 = vld [vmem:[%s0 + $0x1c] sm:$0xf]
  %v40 = vld [vmem:[%s0 + $0x20] sm:$0xf]
  %v41 = vld [vmem:[%s0 + $0x24] sm:$0xf]
  %v42 = vld [vmem:[%s0 + $0x28] sm:$0xf]
  %v43 = vld [vmem:[%s0 + $0x2c] sm:$0xf]
  %v44 = vld [vmem:[%s0 + $0x30] sm:$0xf]
  %v45 = vld [vmem:[%s0 + $0x34] sm:$0xf]
  %v46 = vld [vmem:[%s0 + $0x38] sm:$0xf]
  %v47 = vld [vmem:[%s0 + $0x3c] sm:$0xf]
  %v48 = vld [vmem:[%s1] sm:$0xf]
  %v49 = vld [vmem:[%s1 + $0x4] sm:$0xf]
  %v50 = vld [vmem:[%s1 + $0x8] sm:$0xf]
  %v51 = vld [vmem:[%s1 + $0xc] sm:$0xf]
  %v52 = vld [vmem:[%s1 + $0x10] sm:$0xf]
  %v53 = vld [vmem:[%s1 + $0x14] sm:$0xf]
  %v54 = vld [vmem:[%s1 + $0x18] sm:$0xf]
  %v55 = vld [vmem:[%s1 + $0x1c] sm:$0xf]
  %v56 = vld [vmem:[%s1 + $0x20] sm:$0xf]
  %v57 = vld [vmem:[%s1 + $0x24] sm:$0xf]
  %v58 = vld [vmem:[%s1 + $0x28] sm:$0xf]
  %v59 = vld [vmem:[%s1 + $0x2c] sm:$0xf]
  %v60 = vld [vmem:[%s1 + $0x30] sm:$0xf]
  %v61 = vld [vmem:[%s1 + $0x34] sm:$0xf]
  %v62 = vld [vmem:[%s1 + $0x38] sm:$0xf]
  %v63 = vld [vmem:[%s1 + $0x3c] sm:$0xf]
  %v64 = vld [vmem:[%s2] sm:$0xf]
  %v65 = vld [vmem:[%s2 + $0x4] sm:$0xf]
  %v66 = vld [vmem:[%s2 + $0x8] sm:$0xf]
  %v67 = vld [vmem:[%s2 + $0xc] sm:$0xf]
  %v68 = vld [vmem:[%s2 + $0x10] sm:$0xf]
  %v69 = vld [vmem:[%s2 + $0x14] sm:$0xf]
  %v70 = vld [vmem:[%s2 + $0x18] sm:$0xf]
  %v71 = vld [vmem:[%s2 + $0x1c] sm:$0xf]
  %v72 = vld [vmem:[%s2 + $0x20] sm:$0xf]
  %v73 = vld [vmem:[%s2 + $0x24] sm:$0xf]
  %v74 = vld [vmem:[%s2 + $0x28] sm:$0xf]
  %v75 = vld [vmem:[%s2 + $0x2c] sm:$0xf]
  %v76 = vld [vmem:[%s2 + $0x30] sm:$0xf]
  %v77 = vld [vmem:[%s2 + $0x34] sm:$0xf]
  %v78 = vld [vmem:[%s2 + $0x38] sm:$0xf]
  %v79 = vld [vmem:[%s2 + $0x3c] sm:$0xf]
  %v96 = vunpack.c.l.b16 %v48
  %v97 = vunpack.c.l.b16 %v49
  %v98 = vunpack.c.l.b16 %v50
  %v99 = vunpack.c.l.b16 %v51
  %v100 = vunpack.c.l.b16 %v52
  %v101 = vunpack.c.l.b16 %v53
  %v102 = vunpack.c.l.b16 %v54
  %v103 = vunpack.c.l.b16 %v55
  %v104 = vunpack.c.l.b16 %v56
  %v105 = vunpack.c.l.b16 %v57
  %v106 = vunpack.c.l.b16 %v58
  %v107 = vunpack.c.l.b16 %v59
  %v108 = vunpack.c.l.b16 %v60
  %v109 = vunpack.c.l.b16 %v61
  %v110 = vunpack.c.l.b16 %v62
  %v111 = vunpack.c.l.b16 %v63
  %v112 = vpack.c.b16 %v97, %v96
  %v113 = vpack.c.b16 %v99, %v98
  %v114 = vpack.c.b16 %v101, %v100
  %v115 = vpack.c.b16 %v103, %v102
  %v116 = vpack.c.b16 %v105, %v104
  %v117 = vpack.c.b16 %v107, %v106
  %v118 = vpack.c.b16 %v109, %v108
  %v119 = vpack.c.b16 %v111, %v110
  %v144 = vunpack.c.l.b16 %v64
  %v145 = vunpack.c.l.b16 %v65
  %v146 = vunpack.c.l.b16 %v66
  %v147 = vunpack.c.l.b16 %v67
  %v148 = vunpack.c.l.b16 %v68
  %v149 = vunpack.c.l.b16 %v69
  %v150 = vunpack.c.l.b16 %v70
  %v151 = vunpack.c.l.b16 %v71
  %v152 = vunpack.c.l.b16 %v72
  %v153 = vunpack.c.l.b16 %v73
  %v154 = vunpack.c.l.b16 %v74
  %v155 = vunpack.c.l.b16 %v75
  %v156 = vunpack.c.l.b16 %v76
  %v157 = vunpack.c.l.b16 %v77
  %v158 = vunpack.c.l.b16 %v78
  %v159 = vunpack.c.l.b16 %v79
  %v160 = vpack.c.b16 %v145, %v144
  %v161 = vpack.c.b16 %v147, %v146
  %v162 = vpack.c.b16 %v149, %v148
  %v163 = vpack.c.b16 %v151, %v150
  %v164 = vpack.c.b16 %v153, %v152
  %v165 = vpack.c.b16 %v155, %v154
  %v166 = vpack.c.b16 %v157, %v156
  %v167 = vpack.c.b16 %v159, %v158
  %176 = vmatprep.subr.bf16.mxu0 0
  %177 = vmatpush1.bf16.msra.mxu0 %v167
  %178 = vmatprep.subr.bf16.mxu0 0
  %179 = vmatpush1.bf16.msra.mxu0 %v166
  %180 = vmatprep.subr.bf16.mxu0 0
  %181 = vmatpush1.bf16.msra.mxu0 %v165
  %182 = vmatprep.subr.bf16.mxu0 0
  %183 = vmatpush1.bf16.msra.mxu0 %v164
  %184 = vmatprep.subr.bf16.mxu0 0
  %185 = vmatpush1.bf16.msra.mxu0 %v163
  %186 = vmatprep.subr.bf16.mxu0 0
  %187 = vmatpush1.bf16.msra.mxu0 %v162
  %188 = vmatprep.subr.bf16.mxu0 0
  %189 = vmatpush1.bf16.msra.mxu0 %v161
  %190 = vmatprep.subr.bf16.mxu0 0
  %191 = vmatpush1.bf16.msra.mxu0 %v160
  %192 = vmatprep.subr.bf16.mxu0 0
  %193 = vmatpush2.bf16.msra.mxu0 0
  %194 = vmatprep.subr.bf16.mxu0 0
  %195 = vmatpush2.bf16.msra.mxu0 0
  %196 = vmatprep.subr.bf16.mxu0 0
  %197 = vmatpush2.bf16.msra.mxu0 0
  %198 = vmatprep.subr.bf16.mxu0 0
  %199 = vmatpush2.bf16.msra.mxu0 0
  %200 = vmatprep.subr.bf16.mxu0 0
  %201 = vmatpush2.bf16.msra.mxu0 0
  %202 = vmatprep.subr.bf16.mxu0 0
  %203 = vmatpush2.bf16.msra.mxu0 0
  %204 = vmatprep.subr.bf16.mxu0 0
  %205 = vmatpush2.bf16.msra.mxu0 0
  %206 = vmatprep.subr.bf16.mxu0 0
  %207 = vmatpush2.bf16.msra.mxu0 0
  %208 = vmatprep.mubr.bf16.mxu0 0
  %209 = vmatmul.mubr.bf16.gmra.mxu0 %v112
  %v210 = vpop.f32.mrf.mxu0
  %v211 = vadd.f32 0.0, %v210
  %v212 = vpop.f32.mrf.mxu0
  %v213 = vpop.f32.mrf.mxu0
  %v214 = vadd.f32 0.0, %v213
  %v215 = vpop.f32.mrf.mxu0
  %216 = vmatprep.mubr.bf16.mxu0 0
  %217 = vmatmul.mubr.bf16.gmra.mxu0 %v113
  %v218 = vpop.f32.mrf.mxu0
  %v219 = vadd.f32 0.0, %v218
  %v220 = vpop.f32.mrf.mxu0
  %v221 = vpop.f32.mrf.mxu0
  %v222 = vadd.f32 0.0, %v221
  %v223 = vpop.f32.mrf.mxu0
  %224 = vmatprep.mubr.bf16.mxu0 0
  %225 = vmatmul.mubr.bf16.gmra.mxu0 %v114
  %v226 = vpop.f32.mrf.mxu0
  %v227 = vadd.f32 0.0, %v226
  %v228 = vpop.f32.mrf.mxu0
  %v229 = vpop.f32.mrf.mxu0
  %v230 = vadd.f32 0.0, %v229
  %v231 = vpop.f32.mrf.mxu0
  %232 = vmatprep.mubr.bf16.mxu0 0
  %233 = vmatmul.mubr.bf16.gmra.mxu0 %v115
  %v234 = vpop.f32.mrf.mxu0
  %v235 = vadd.f32 0.0, %v234
  %v236 = vpop.f32.mrf.mxu0
  %v237 = vpop.f32.mrf.mxu0
  %v238 = vadd.f32 0.0, %v237
  %v239 = vpop.f32.mrf.mxu0
  %240 = vmatprep.mubr.bf16.mxu0 0
  %241 = vmatmul.mubr.bf16.gmra.mxu0 %v116
  %v242 = vpop.f32.mrf.mxu0
  %v243 = vadd.f32 0.0, %v242
  %v244 = vpop.f32.mrf.mxu0
  %v245 = vpop.f32.mrf.mxu0
  %v246 = vadd.f32 0.0, %v245
  %v247 = vpop.f32.mrf.mxu0
  %248 = vmatprep.mubr.bf16.mxu0 0
  %249 = vmatmul.mubr.bf16.gmra.mxu0 %v117
  %v250 = vpop.f32.mrf.mxu0
  %v251 = vadd.f32 0.0, %v250
  %v252 = vpop.f32.mrf.mxu0
  %v253 = vpop.f32.mrf.mxu0
  %v254 = vadd.f32 0.0, %v253
  %v255 = vpop.f32.mrf.mxu0
  %256 = vmatprep.mubr.bf16.mxu0 0
  %257 = vmatmul.mubr.bf16.gmra.mxu0 %v118
  %v258 = vpop.f32.mrf.mxu0
  %v259 = vadd.f32 0.0, %v258
  %v260 = vpop.f32.mrf.mxu0
  %v261 = vpop.f32.mrf.mxu0
  %v262 = vadd.f32 0.0, %v261
  %v263 = vpop.f32.mrf.mxu0
  %264 = vmatprep.mubr.bf16.mxu0 0
  %265 = vmatmul.mubr.bf16.gmra.mxu0 %v119
  %v266 = vpop.f32.mrf.mxu0
  %v267 = vadd.f32 0.0, %v266
  %v268 = vpop.f32.mrf.mxu0
  %v269 = vpop.f32.mrf.mxu0
  %v270 = vadd.f32 0.0, %v269
  %v271 = vpop.f32.mrf.mxu0
  %272 = vdwg.mxu0
  %v273 = vpack.c.bf16 %v214, %v211
  %v274 = vpack.c.bf16 %v222, %v219
  %v275 = vpack.c.bf16 %v230, %v227
  %v276 = vpack.c.bf16 %v238, %v235
  %v277 = vpack.c.bf16 %v246, %v243
  %v278 = vpack.c.bf16 %v254, %v251
  %v279 = vpack.c.bf16 %v262, %v259
  %v280 = vpack.c.bf16 %v270, %v267
  %v281 = vld [vmem:[%s3] sm:$0x1]
  %v283 = vlaneseq
  %v284 = vshrl.u32 %v283, 7
  %v285 = vsub.s32 0, %v284
  %v286 = vrot.slane %v281, %v285
  %v304 = vunpack.c.l.b16 %v32
  %v305 = vunpack.c.l.b16 %v33
  %v306 = vunpack.c.l.b16 %v34
  %v307 = vunpack.c.l.b16 %v35
  %v308 = vunpack.c.l.b16 %v36
  %v309 = vunpack.c.l.b16 %v37
  %v310 = vunpack.c.l.b16 %v38
  %v311 = vunpack.c.l.b16 %v39
  %v312 = vunpack.c.l.b16 %v40
  %v313 = vunpack.c.l.b16 %v41
  %v314 = vunpack.c.l.b16 %v42
  %v315 = vunpack.c.l.b16 %v43
  %v316 = vunpack.c.l.b16 %v44
  %v317 = vunpack.c.l.b16 %v45
  %v318 = vunpack.c.l.b16 %v46
  %v319 = vunpack.c.l.b16 %v47
  %v320 = vpack.c.b16 %v305, %v304
  %v321 = vpack.c.b16 %v307, %v306
  %v322 = vpack.c.b16 %v309, %v308
  %v323 = vpack.c.b16 %v311, %v310
  %v324 = vpack.c.b16 %v313, %v312
  %v325 = vpack.c.b16 %v315, %v314
  %v326 = vpack.c.b16 %v317, %v316
  %v327 = vpack.c.b16 %v319, %v318
  %336 = vmatprep.subr.bf16.mxu0 0
  %337 = vmatpush1.bf16.msra.mxu0 %v280
  %338 = vmatprep.subr.bf16.mxu0 0
  %339 = vmatpush1.bf16.msra.mxu0 %v279
  %340 = vmatprep.subr.bf16.mxu0 0
  %341 = vmatpush1.bf16.msra.mxu0 %v278
  %342 = vmatprep.subr.bf16.mxu0 0
  %343 = vmatpush1.bf16.msra.mxu0 %v277
  %344 = vmatprep.subr.bf16.mxu0 0
  %345 = vmatpush1.bf16.msra.mxu0 %v276
  %346 = vmatprep.subr.bf16.mxu0 0
  %347 = vmatpush1.bf16.msra.mxu0 %v275
  %348 = vmatprep.subr.bf16.mxu0 0
  %349 = vmatpush1.bf16.msra.mxu0 %v274
  %350 = vmatprep.subr.bf16.mxu0 0
  %351 = vmatpush1.bf16.msra.mxu0 %v273
  %352 = vmatprep.subr.bf16.mxu0 0
  %353 = vmatpush2.bf16.msra.mxu0 0
  %354 = vmatprep.subr.bf16.mxu0 0
  %355 = vmatpush2.bf16.msra.mxu0 0
  %356 = vmatprep.subr.bf16.mxu0 0
  %357 = vmatpush2.bf16.msra.mxu0 0
  %358 = vmatprep.subr.bf16.mxu0 0
  %359 = vmatpush2.bf16.msra.mxu0 0
  %360 = vmatprep.subr.bf16.mxu0 0
  %361 = vmatpush2.bf16.msra.mxu0 0
  %362 = vmatprep.subr.bf16.mxu0 0
  %363 = vmatpush2.bf16.msra.mxu0 0
  %364 = vmatprep.subr.bf16.mxu0 0
  %365 = vmatpush2.bf16.msra.mxu0 0
  %366 = vmatprep.subr.bf16.mxu0 0
  %367 = vmatpush2.bf16.msra.mxu0 0
  %368 = vmatprep.mubr.bf16.mxu0 0
  %369 = vmatmul.mubr.bf16.gmra.mxu0 %v320
  %v370 = vpop.f32.mrf.mxu0
  %v371 = vadd.f32 %v286, %v370
  %v372 = vpop.f32.mrf.mxu0
  %v373 = vpop.f32.mrf.mxu0
  %v374 = vadd.f32 %v286, %v373
  %v375 = vpop.f32.mrf.mxu0
  %376 = vmatprep.mubr.bf16.mxu0 0
  %377 = vmatmul.mubr.bf16.gmra.mxu0 %v321
  %v378 = vpop.f32.mrf.mxu0
  %v379 = vadd.f32 %v286, %v378
  %v380 = vpop.f32.mrf.mxu0
  %v381 = vpop.f32.mrf.mxu0
  %v382 = vadd.f32 %v286, %v381
  %v383 = vpop.f32.mrf.mxu0
  %384 = vmatprep.mubr.bf16.mxu0 0
  %385 = vmatmul.mubr.bf16.gmra.mxu0 %v322
  %v386 = vpop.f32.mrf.mxu0
  %v387 = vadd.f32 %v286, %v386
  %v388 = vpop.f32.mrf.mxu0
  %v389 = vpop.f32.mrf.mxu0
  %v390 = vadd.f32 %v286, %v389
  %v391 = vpop.f32.mrf.mxu0
  %392 = vmatprep.mubr.bf16.mxu0 0
  %393 = vmatmul.mubr.bf16.gmra.mxu0 %v323
  %v394 = vpop.f32.mrf.mxu0
  %v395 = vadd.f32 %v286, %v394
  %v396 = vpop.f32.mrf.mxu0
  %v397 = vpop.f32.mrf.mxu0
  %v398 = vadd.f32 %v286, %v397
  %v399 = vpop.f32.mrf.mxu0
  %400 = vmatprep.mubr.bf16.mxu0 0
  %401 = vmatmul.mubr.bf16.gmra.mxu0 %v324
  %v402 = vpop.f32.mrf.mxu0
  %v403 = vadd.f32 %v286, %v402
  %v404 = vpop.f32.mrf.mxu0
  %v405 = vpop.f32.mrf.mxu0
  %v406 = vadd.f32 %v286, %v405
  %v407 = vpop.f32.mrf.mxu0
  %408 = vmatprep.mubr.bf16.mxu0 0
  %409 = vmatmul.mubr.bf16.gmra.mxu0 %v325
  %v410 = vpop.f32.mrf.mxu0
  %v411 = vadd.f32 %v286, %v410
  %v412 = vpop.f32.mrf.mxu0
  %v413 = vpop.f32.mrf.mxu0
  %v414 = vadd.f32 %v286, %v413
  %v415 = vpop.f32.mrf.mxu0
  %416 = vmatprep.mubr.bf16.mxu0 0
  %417 = vmatmul.mubr.bf16.gmra.mxu0 %v326
  %v418 = vpop.f32.mrf.mxu0
  %v419 = vadd.f32 %v286, %v418
  %v420 = vpop.f32.mrf.mxu0
  %v421 = vpop.f32.mrf.mxu0
  %v422 = vadd.f32 %v286, %v421
  %v423 = vpop.f32.mrf.mxu0
  %424 = vmatprep.mubr.bf16.mxu0 0
  %425 = vmatmul.mubr.bf16.gmra.mxu0 %v327
  %v426 = vpop.f32.mrf.mxu0
  %v427 = vadd.f32 %v286, %v426
  %v428 = vpop.f32.mrf.mxu0
  %v429 = vpop.f32.mrf.mxu0
  %v430 = vadd.f32 %v286, %v429
  %v431 = vpop.f32.mrf.mxu0
  %432 = vdwg.mxu0
  %v433 = vmax.f32 %v371, 0.0
  %v434 = vmax.f32 %v374, 0.0
  %v435 = vmax.f32 %v379, 0.0
  %v436 = vmax.f32 %v382, 0.0
  %v437 = vmax.f32 %v387, 0.0
  %v438 = vmax.f32 %v390, 0.0
  %v439 = vmax.f32 %v395, 0.0
  %v440 = vmax.f32 %v398, 0.0
  %v441 = vmax.f32 %v403, 0.0
  %v442 = vmax.f32 %v406, 0.0
  %v443 = vmax.f32 %v411, 0.0
  %v444 = vmax.f32 %v414, 0.0
  %v445 = vmax.f32 %v419, 0.0
  %v446 = vmax.f32 %v422, 0.0
  %v447 = vmax.f32 %v427, 0.0
  %v448 = vmax.f32 %v430, 0.0
  %v449 = vpack.c.bf16 %v434, %v433
  %v450 = vpack.c.bf16 %v436, %v435
  %v451 = vpack.c.bf16 %v438, %v437
  %v452 = vpack.c.bf16 %v440, %v439
  %v453 = vpack.c.bf16 %v442, %v441
  %v454 = vpack.c.bf16 %v444, %v443
  %v455 = vpack.c.bf16 %v446, %v445
  %v456 = vpack.c.bf16 %v448, %v447
  %v457 = vld [vmem:[%s4] sm:$0xf]
  %v458 = vld [vmem:[%s4 + $0x4] sm:$0xf]
  %v459 = vld [vmem:[%s4 + $0x8] sm:$0xf]
  %v460 = vld [vmem:[%s4 + $0xc] sm:$0xf]
  %v461 = vld [vmem:[%s4 + $0x10] sm:$0xf]
  %v462 = vld [vmem:[%s4 + $0x14] sm:$0xf]
  %v463 = vld [vmem:[%s4 + $0x18] sm:$0xf]
  %v464 = vld [vmem:[%s4 + $0x1c] sm:$0xf]
  %v465 = vld [vmem:[%s4 + $0x20] sm:$0xf]
  %v466 = vld [vmem:[%s4 + $0x24] sm:$0xf]
  %v467 = vld [vmem:[%s4 + $0x28] sm:$0xf]
  %v468 = vld [vmem:[%s4 + $0x2c] sm:$0xf]
  %v469 = vld [vmem:[%s4 + $0x30] sm:$0xf]
  %v470 = vld [vmem:[%s4 + $0x34] sm:$0xf]
  %v471 = vld [vmem:[%s4 + $0x38] sm:$0xf]
  %v472 = vld [vmem:[%s4 + $0x3c] sm:$0xf]
  %v489 = vunpack.c.l.b16 %v457
  %v490 = vunpack.c.l.b16 %v458
  %v491 = vunpack.c.l.b16 %v459
  %v492 = vunpack.c.l.b16 %v460
  %v493 = vunpack.c.l.b16 %v461
  %v494 = vunpack.c.l.b16 %v462
  %v495 = vunpack.c.l.b16 %v463
  %v496 = vunpack.c.l.b16 %v464
  %v497 = vunpack.c.l.b16 %v465
  %v498 = vunpack.c.l.b16 %v466
  %v499 = vunpack.c.l.b16 %v467
  %v500 = vunpack.c.l.b16 %v468
  %v501 = vunpack.c.l.b16 %v469
  %v502 = vunpack.c.l.b16 %v470
  %v503 = vunpack.c.l.b16 %v471
  %v504 = vunpack.c.l.b16 %v472
  %v505 = vpack.c.b16 %v490, %v489
  %v506 = vpack.c.b16 %v492, %v491
  %v507 = vpack.c.b16 %v494, %v493
  %v508 = vpack.c.b16 %v496, %v495
  %v509 = vpack.c.b16 %v498, %v497
  %v510 = vpack.c.b16 %v500, %v499
  %v511 = vpack.c.b16 %v502, %v501
  %v512 = vpack.c.b16 %v504, %v503
  %521 = vmatprep.subr.bf16.mxu0 0
  %522 = vmatpush1.bf16.msra.mxu0 %v512
  %523 = vmatprep.subr.bf16.mxu0 0
  %524 = vmatpush1.bf16.msra.mxu0 %v511
  %525 = vmatprep.subr.bf16.mxu0 0
  %526 = vmatpush1.bf16.msra.mxu0 %v510
  %527 = vmatprep.subr.bf16.mxu0 0
  %528 = vmatpush1.bf16.msra.mxu0 %v509
  %529 = vmatprep.subr.bf16.mxu0 0
  %530 = vmatpush1.bf16.msra.mxu0 %v508
  %531 = vmatprep.subr.bf16.mxu0 0
  %532 = vmatpush1.bf16.msra.mxu0 %v507
  %533 = vmatprep.subr.bf16.mxu0 0
  %534 = vmatpush1.bf16.msra.mxu0 %v506
  %535 = vmatprep.subr.bf16.mxu0 0
  %536 = vmatpush1.bf16.msra.mxu0 %v505
  %537 = vmatprep.subr.bf16.mxu0 0
  %538 = vmatpush2.bf16.msra.mxu0 0
  %539 = vmatprep.subr.bf16.mxu0 0
  %540 = vmatpush2.bf16.msra.mxu0 0
  %541 = vmatprep.subr.bf16.mxu0 0
  %542 = vmatpush2.bf16.msra.mxu0 0
  %543 = vmatprep.subr.bf16.mxu0 0
  %544 = vmatpush2.bf16.msra.mxu0 0
  %545 = vmatprep.subr.bf16.mxu0 0
  %546 = vmatpush2.bf16.msra.mxu0 0
  %547 = vmatprep.subr.bf16.mxu0 0
  %548 = vmatpush2.bf16.msra.mxu0 0
  %549 = vmatprep.subr.bf16.mxu0 0
  %550 = vmatpush2.bf16.msra.mxu0 0
  %551 = vmatprep.subr.bf16.mxu0 0
  %552 = vmatpush2.bf16.msra.mxu0 0
  %553 = vmatprep.mubr.bf16.mxu0 0
  %554 = vmatmul.mubr.bf16.gmra.mxu0 %v449
  %v555 = vpop.f32.mrf.mxu0
  %v556 = vadd.f32 0.0, %v555
  %v557 = vpop.f32.mrf.mxu0
  %v558 = vpop.f32.mrf.mxu0
  %v559 = vadd.f32 0.0, %v558
  %v560 = vpop.f32.mrf.mxu0
  %561 = vmatprep.mubr.bf16.mxu0 0
  %562 = vmatmul.mubr.bf16.gmra.mxu0 %v450
  %v563 = vpop.f32.mrf.mxu0
  %v564 = vadd.f32 0.0, %v563
  %v565 = vpop.f32.mrf.mxu0
  %v566 = vpop.f32.mrf.mxu0
  %v567 = vadd.f32 0.0, %v566
  %v568 = vpop.f32.mrf.mxu0
  %569 = vmatprep.mubr.bf16.mxu0 0
  %570 = vmatmul.mubr.bf16.gmra.mxu0 %v451
  %v571 = vpop.f32.mrf.mxu0
  %v572 = vadd.f32 0.0, %v571
  %v573 = vpop.f32.mrf.mxu0
  %v574 = vpop.f32.mrf.mxu0
  %v575 = vadd.f32 0.0, %v574
  %v576 = vpop.f32.mrf.mxu0
  %577 = vmatprep.mubr.bf16.mxu0 0
  %578 = vmatmul.mubr.bf16.gmra.mxu0 %v452
  %v579 = vpop.f32.mrf.mxu0
  %v580 = vadd.f32 0.0, %v579
  %v581 = vpop.f32.mrf.mxu0
  %v582 = vpop.f32.mrf.mxu0
  %v583 = vadd.f32 0.0, %v582
  %v584 = vpop.f32.mrf.mxu0
  %585 = vmatprep.mubr.bf16.mxu0 0
  %586 = vmatmul.mubr.bf16.gmra.mxu0 %v453
  %v587 = vpop.f32.mrf.mxu0
  %v588 = vadd.f32 0.0, %v587
  %v589 = vpop.f32.mrf.mxu0
  %v590 = vpop.f32.mrf.mxu0
  %v591 = vadd.f32 0.0, %v590
  %v592 = vpop.f32.mrf.mxu0
  %593 = vmatprep.mubr.bf16.mxu0 0
  %594 = vmatmul.mubr.bf16.gmra.mxu0 %v454
  %v595 = vpop.f32.mrf.mxu0
  %v596 = vadd.f32 0.0, %v595
  %v597 = vpop.f32.mrf.mxu0
  %v598 = vpop.f32.mrf.mxu0
  %v599 = vadd.f32 0.0, %v598
  %v600 = vpop.f32.mrf.mxu0
  %601 = vmatprep.mubr.bf16.mxu0 0
  %602 = vmatmul.mubr.bf16.gmra.mxu0 %v455
  %v603 = vpop.f32.mrf.mxu0
  %v604 = vadd.f32 0.0, %v603
  %v605 = vpop.f32.mrf.mxu0
  %v606 = vpop.f32.mrf.mxu0
  %v607 = vadd.f32 0.0, %v606
  %v608 = vpop.f32.mrf.mxu0
  %609 = vmatprep.mubr.bf16.mxu0 0
  %610 = vmatmul.mubr.bf16.gmra.mxu0 %v456
  %v611 = vpop.f32.mrf.mxu0
  %v612 = vadd.f32 0.0, %v611
  %v613 = vpop.f32.mrf.mxu0
  %v614 = vpop.f32.mrf.mxu0
  %v615 = vadd.f32 0.0, %v614
  %v616 = vpop.f32.mrf.mxu0
  %617 = vdwg.mxu0
  %v618 = vpack.c.bf16 %v559, %v556
  %v619 = vpack.c.bf16 %v567, %v564
  %v620 = vpack.c.bf16 %v575, %v572
  %v621 = vpack.c.bf16 %v583, %v580
  %v622 = vpack.c.bf16 %v591, %v588
  %v623 = vpack.c.bf16 %v599, %v596
  %v624 = vpack.c.bf16 %v607, %v604
  %v625 = vpack.c.bf16 %v615, %v612
  %v626 = vld [vmem:[%s5] sm:$0x1]
  %v628 = vlaneseq
  %v629 = vshrl.u32 %v628, 7
  %v630 = vsub.s32 0, %v629
  %v631 = vrot.slane %v626, %v630
  %633 = vmatprep.subr.bf16.mxu0 0
  %634 = vmatpush1.bf16.msra.mxu0 %v625
  %635 = vmatprep.subr.bf16.mxu0 0
  %636 = vmatpush1.bf16.msra.mxu0 %v624
  %637 = vmatprep.subr.bf16.mxu0 0
  %638 = vmatpush1.bf16.msra.mxu0 %v623
  %639 = vmatprep.subr.bf16.mxu0 0
  %640 = vmatpush1.bf16.msra.mxu0 %v622
  %641 = vmatprep.subr.bf16.mxu0 0
  %642 = vmatpush1.bf16.msra.mxu0 %v621
  %643 = vmatprep.subr.bf16.mxu0 0
  %644 = vmatpush1.bf16.msra.mxu0 %v620
  %645 = vmatprep.subr.bf16.mxu0 0
  %646 = vmatpush1.bf16.msra.mxu0 %v619
  %647 = vmatprep.subr.bf16.mxu0 0
  %648 = vmatpush1.bf16.msra.mxu0 %v618
  %649 = vmatprep.subr.bf16.mxu0 0
  %650 = vmatpush2.bf16.msra.mxu0 0
  %651 = vmatprep.subr.bf16.mxu0 0
  %652 = vmatpush2.bf16.msra.mxu0 0
  %653 = vmatprep.subr.bf16.mxu0 0
  %654 = vmatpush2.bf16.msra.mxu0 0
  %655 = vmatprep.subr.bf16.mxu0 0
  %656 = vmatpush2.bf16.msra.mxu0 0
  %657 = vmatprep.subr.bf16.mxu0 0
  %658 = vmatpush2.bf16.msra.mxu0 0
  %659 = vmatprep.subr.bf16.mxu0 0
  %660 = vmatpush2.bf16.msra.mxu0 0
  %661 = vmatprep.subr.bf16.mxu0 0
  %662 = vmatpush2.bf16.msra.mxu0 0
  %663 = vmatprep.subr.bf16.mxu0 0
  %664 = vmatpush2.bf16.msra.mxu0 0
  %665 = vmatprep.mubr.bf16.mxu0 0
  %666 = vmatmul.mubr.bf16.gmra.mxu0 %v320
  %v667 = vpop.f32.mrf.mxu0
  %v668 = vadd.f32 %v631, %v667
  %v669 = vpop.f32.mrf.mxu0
  %v670 = vpop.f32.mrf.mxu0
  %v671 = vadd.f32 %v631, %v670
  %v672 = vpop.f32.mrf.mxu0
  %673 = vmatprep.mubr.bf16.mxu0 0
  %674 = vmatmul.mubr.bf16.gmra.mxu0 %v321
  %v675 = vpop.f32.mrf.mxu0
  %v676 = vadd.f32 %v631, %v675
  %v677 = vpop.f32.mrf.mxu0
  %v678 = vpop.f32.mrf.mxu0
  %v679 = vadd.f32 %v631, %v678
  %v680 = vpop.f32.mrf.mxu0
  %681 = vmatprep.mubr.bf16.mxu0 0
  %682 = vmatmul.mubr.bf16.gmra.mxu0 %v322
  %v683 = vpop.f32.mrf.mxu0
  %v684 = vadd.f32 %v631, %v683
  %v685 = vpop.f32.mrf.mxu0
  %v686 = vpop.f32.mrf.mxu0
  %v687 = vadd.f32 %v631, %v686
  %v688 = vpop.f32.mrf.mxu0
  %689 = vmatprep.mubr.bf16.mxu0 0
  %690 = vmatmul.mubr.bf16.gmra.mxu0 %v323
  %v691 = vpop.f32.mrf.mxu0
  %v692 = vadd.f32 %v631, %v691
  %v693 = vpop.f32.mrf.mxu0
  %v694 = vpop.f32.mrf.mxu0
  %v695 = vadd.f32 %v631, %v694
  %v696 = vpop.f32.mrf.mxu0
  %697 = vmatprep.mubr.bf16.mxu0 0
  %698 = vmatmul.mubr.bf16.gmra.mxu0 %v324
  %v699 = vpop.f32.mrf.mxu0
  %v700 = vadd.f32 %v631, %v699
  %v701 = vpop.f32.mrf.mxu0
  %v702 = vpop.f32.mrf.mxu0
  %v703 = vadd.f32 %v631, %v702
  %v704 = vpop.f32.mrf.mxu0
  %705 = vmatprep.mubr.bf16.mxu0 0
  %706 = vmatmul.mubr.bf16.gmra.mxu0 %v325
  %v707 = vpop.f32.mrf.mxu0
  %v708 = vadd.f32 %v631, %v707
  %v709 = vpop.f32.mrf.mxu0
  %v710 = vpop.f32.mrf.mxu0
  %v711 = vadd.f32 %v631, %v710
  %v712 = vpop.f32.mrf.mxu0
  %713 = vmatprep.mubr.bf16.mxu0 0
  %714 = vmatmul.mubr.bf16.gmra.mxu0 %v326
  %v715 = vpop.f32.mrf.mxu0
  %v716 = vadd.f32 %v631, %v715
  %v717 = vpop.f32.mrf.mxu0
  %v718 = vpop.f32.mrf.mxu0
  %v719 = vadd.f32 %v631, %v718
  %v720 = vpop.f32.mrf.mxu0
  %721 = vmatprep.mubr.bf16.mxu0 0
  %722 = vmatmul.mubr.bf16.gmra.mxu0 %v327
  %v723 = vpop.f32.mrf.mxu0
  %v724 = vadd.f32 %v631, %v723
  %v725 = vpop.f32.mrf.mxu0
  %v726 = vpop.f32.mrf.mxu0
  %v727 = vadd.f32 %v631, %v726
  %v728 = vpop.f32.mrf.mxu0
  %729 = vdwg.mxu0
  %v730 = vmax.f32 %v668, 0.0
  %v731 = vmax.f32 %v671, 0.0
  %v732 = vmax.f32 %v676, 0.0
  %v733 = vmax.f32 %v679, 0.0
  %v734 = vmax.f32 %v684, 0.0
  %v735 = vmax.f32 %v687, 0.0
  %v736 = vmax.f32 %v692, 0.0
  %v737 = vmax.f32 %v695, 0.0
  %v738 = vmax.f32 %v700, 0.0
  %v739 = vmax.f32 %v703, 0.0
  %v740 = vmax.f32 %v708, 0.0
  %v741 = vmax.f32 %v711, 0.0
  %v742 = vmax.f32 %v716, 0.0
  %v743 = vmax.f32 %v719, 0.0
  %v744 = vmax.f32 %v724, 0.0
  %v745 = vmax.f32 %v727, 0.0
  %v746 = vpack.c.bf16 %v731, %v730
  %v747 = vpack.c.bf16 %v733, %v732
  %v748 = vpack.c.bf16 %v735, %v734
  %v749 = vpack.c.bf16 %v737, %v736
  %v750 = vpack.c.bf16 %v739, %v738
  %v751 = vpack.c.bf16 %v741, %v740
  %v752 = vpack.c.bf16 %v743, %v742
  %v753 = vpack.c.bf16 %v745, %v744
  %v754 = vld [vmem:[%s6] sm:$0xf]
  %v755 = vld [vmem:[%s6 + $0x4] sm:$0xf]
  %v756 = vld [vmem:[%s6 + $0x8] sm:$0xf]
  %v757 = vld [vmem:[%s6 + $0xc] sm:$0xf]
  %v758 = vld [vmem:[%s6 + $0x10] sm:$0xf]
  %v759 = vld [vmem:[%s6 + $0x14] sm:$0xf]
  %v760 = vld [vmem:[%s6 + $0x18] sm:$0xf]
  %v761 = vld [vmem:[%s6 + $0x1c] sm:$0xf]
  %v762 = vld [vmem:[%s6 + $0x20] sm:$0xf]
  %v763 = vld [vmem:[%s6 + $0x24] sm:$0xf]
  %v764 = vld [vmem:[%s6 + $0x28] sm:$0xf]
  %v765 = vld [vmem:[%s6 + $0x2c] sm:$0xf]
  %v766 = vld [vmem:[%s6 + $0x30] sm:$0xf]
  %v767 = vld [vmem:[%s6 + $0x34] sm:$0xf]
  %v768 = vld [vmem:[%s6 + $0x38] sm:$0xf]
  %v769 = vld [vmem:[%s6 + $0x3c] sm:$0xf]
  %v786 = vunpack.c.l.b16 %v754
  %v787 = vunpack.c.l.b16 %v755
  %v788 = vunpack.c.l.b16 %v756
  %v789 = vunpack.c.l.b16 %v757
  %v790 = vunpack.c.l.b16 %v758
  %v791 = vunpack.c.l.b16 %v759
  %v792 = vunpack.c.l.b16 %v760
  %v793 = vunpack.c.l.b16 %v761
  %v794 = vunpack.c.l.b16 %v762
  %v795 = vunpack.c.l.b16 %v763
  %v796 = vunpack.c.l.b16 %v764
  %v797 = vunpack.c.l.b16 %v765
  %v798 = vunpack.c.l.b16 %v766
  %v799 = vunpack.c.l.b16 %v767
  %v800 = vunpack.c.l.b16 %v768
  %v801 = vunpack.c.l.b16 %v769
  %v802 = vpack.c.b16 %v787, %v786
  %v803 = vpack.c.b16 %v789, %v788
  %v804 = vpack.c.b16 %v791, %v790
  %v805 = vpack.c.b16 %v793, %v792
  %v806 = vpack.c.b16 %v795, %v794
  %v807 = vpack.c.b16 %v797, %v796
  %v808 = vpack.c.b16 %v799, %v798
  %v809 = vpack.c.b16 %v801, %v800
  %818 = vmatprep.subr.bf16.mxu0 0
  %819 = vmatpush1.bf16.msra.mxu0 %v809
  %820 = vmatprep.subr.bf16.mxu0 0
  %821 = vmatpush1.bf16.msra.mxu0 %v808
  %822 = vmatprep.subr.bf16.mxu0 0
  %823 = vmatpush1.bf16.msra.mxu0 %v807
  %824 = vmatprep.subr.bf16.mxu0 0
  %825 = vmatpush1.bf16.msra.mxu0 %v806
  %826 = vmatprep.subr.bf16.mxu0 0
  %827 = vmatpush1.bf16.msra.mxu0 %v805
  %828 = vmatprep.subr.bf16.mxu0 0
  %829 = vmatpush1.bf16.msra.mxu0 %v804
  %830 = vmatprep.subr.bf16.mxu0 0
  %831 = vmatpush1.bf16.msra.mxu0 %v803
  %832 = vmatprep.subr.bf16.mxu0 0
  %833 = vmatpush1.bf16.msra.mxu0 %v802
  %834 = vmatprep.subr.bf16.mxu0 0
  %835 = vmatpush2.bf16.msra.mxu0 0
  %836 = vmatprep.subr.bf16.mxu0 0
  %837 = vmatpush2.bf16.msra.mxu0 0
  %838 = vmatprep.subr.bf16.mxu0 0
  %839 = vmatpush2.bf16.msra.mxu0 0
  %840 = vmatprep.subr.bf16.mxu0 0
  %841 = vmatpush2.bf16.msra.mxu0 0
  %842 = vmatprep.subr.bf16.mxu0 0
  %843 = vmatpush2.bf16.msra.mxu0 0
  %844 = vmatprep.subr.bf16.mxu0 0
  %845 = vmatpush2.bf16.msra.mxu0 0
  %846 = vmatprep.subr.bf16.mxu0 0
  %847 = vmatpush2.bf16.msra.mxu0 0
  %848 = vmatprep.subr.bf16.mxu0 0
  %849 = vmatpush2.bf16.msra.mxu0 0
  %850 = vmatprep.mubr.bf16.mxu0 0
  %851 = vmatmul.mubr.bf16.gmra.mxu0 %v746
  %v852 = vpop.f32.mrf.mxu0
  %v853 = vadd.f32 0.0, %v852
  %v854 = vpop.f32.mrf.mxu0
  %v855 = vpop.f32.mrf.mxu0
  %v856 = vadd.f32 0.0, %v855
  %v857 = vpop.f32.mrf.mxu0
  %858 = vmatprep.mubr.bf16.mxu0 0
  %859 = vmatmul.mubr.bf16.gmra.mxu0 %v747
  %v860 = vpop.f32.mrf.mxu0
  %v861 = vadd.f32 0.0, %v860
  %v862 = vpop.f32.mrf.mxu0
  %v863 = vpop.f32.mrf.mxu0
  %v864 = vadd.f32 0.0, %v863
  %v865 = vpop.f32.mrf.mxu0
  %866 = vmatprep.mubr.bf16.mxu0 0
  %867 = vmatmul.mubr.bf16.gmra.mxu0 %v748
  %v868 = vpop.f32.mrf.mxu0
  %v869 = vadd.f32 0.0, %v868
  %v870 = vpop.f32.mrf.mxu0
  %v871 = vpop.f32.mrf.mxu0
  %v872 = vadd.f32 0.0, %v871
  %v873 = vpop.f32.mrf.mxu0
  %874 = vmatprep.mubr.bf16.mxu0 0
  %875 = vmatmul.mubr.bf16.gmra.mxu0 %v749
  %v876 = vpop.f32.mrf.mxu0
  %v877 = vadd.f32 0.0, %v876
  %v878 = vpop.f32.mrf.mxu0
  %v879 = vpop.f32.mrf.mxu0
  %v880 = vadd.f32 0.0, %v879
  %v881 = vpop.f32.mrf.mxu0
  %882 = vmatprep.mubr.bf16.mxu0 0
  %883 = vmatmul.mubr.bf16.gmra.mxu0 %v750
  %v884 = vpop.f32.mrf.mxu0
  %v885 = vadd.f32 0.0, %v884
  %v886 = vpop.f32.mrf.mxu0
  %v887 = vpop.f32.mrf.mxu0
  %v888 = vadd.f32 0.0, %v887
  %v889 = vpop.f32.mrf.mxu0
  %890 = vmatprep.mubr.bf16.mxu0 0
  %891 = vmatmul.mubr.bf16.gmra.mxu0 %v751
  %v892 = vpop.f32.mrf.mxu0
  %v893 = vadd.f32 0.0, %v892
  %v894 = vpop.f32.mrf.mxu0
  %v895 = vpop.f32.mrf.mxu0
  %v896 = vadd.f32 0.0, %v895
  %v897 = vpop.f32.mrf.mxu0
  %898 = vmatprep.mubr.bf16.mxu0 0
  %899 = vmatmul.mubr.bf16.gmra.mxu0 %v752
  %v900 = vpop.f32.mrf.mxu0
  %v901 = vadd.f32 0.0, %v900
  %v902 = vpop.f32.mrf.mxu0
  %v903 = vpop.f32.mrf.mxu0
  %v904 = vadd.f32 0.0, %v903
  %v905 = vpop.f32.mrf.mxu0
  %906 = vmatprep.mubr.bf16.mxu0 0
  %907 = vmatmul.mubr.bf16.gmra.mxu0 %v753
  %v908 = vpop.f32.mrf.mxu0
  %v909 = vadd.f32 0.0, %v908
  %v910 = vpop.f32.mrf.mxu0
  %v911 = vpop.f32.mrf.mxu0
  %v912 = vadd.f32 0.0, %v911
  %v913 = vpop.f32.mrf.mxu0
  %914 = vdwg.mxu0
  %915 = vst [vmem:[%s8] sm:$0xff] %v853
  %916 = vst [vmem:[%s8 + $0x8] sm:$0xff] %v856
  %917 = vst [vmem:[%s8 + $0x10] sm:$0xff] %v861
  %918 = vst [vmem:[%s8 + $0x18] sm:$0xff] %v864
  %919 = vst [vmem:[%s8 + $0x20] sm:$0xff] %v869
  %920 = vst [vmem:[%s8 + $0x28] sm:$0xff] %v872
  %921 = vst [vmem:[%s8 + $0x30] sm:$0xff] %v877
  %922 = vst [vmem:[%s8 + $0x38] sm:$0xff] %v880
  %923 = vst [vmem:[%s8 + $0x40] sm:$0xff] %v885
  %924 = vst [vmem:[%s8 + $0x48] sm:$0xff] %v888
  %925 = vst [vmem:[%s8 + $0x50] sm:$0xff] %v893
  %926 = vst [vmem:[%s8 + $0x58] sm:$0xff] %v896
  %927 = vst [vmem:[%s8 + $0x60] sm:$0xff] %v901
  %928 = vst [vmem:[%s8 + $0x68] sm:$0xff] %v904
  %929 = vst [vmem:[%s8 + $0x70] sm:$0xff] %v909
  %930 = vst [vmem:[%s8 + $0x78] sm:$0xff] %v912
  %v931 = vld [vmem:[%s7] sm:$0xf]
  %v932 = vld [vmem:[%s7 + $0x4] sm:$0xf]
  %v933 = vld [vmem:[%s7 + $0x8] sm:$0xf]
  %v934 = vld [vmem:[%s7 + $0xc] sm:$0xf]
  %v935 = vld [vmem:[%s7 + $0x10] sm:$0xf]
  %v936 = vld [vmem:[%s7 + $0x14] sm:$0xf]
  %v937 = vld [vmem:[%s7 + $0x18] sm:$0xf]
  %v938 = vld [vmem:[%s7 + $0x1c] sm:$0xf]
  %v939 = vld [vmem:[%s7 + $0x20] sm:$0xf]
  %v940 = vld [vmem:[%s7 + $0x24] sm:$0xf]
  %v941 = vld [vmem:[%s7 + $0x28] sm:$0xf]
  %v942 = vld [vmem:[%s7 + $0x2c] sm:$0xf]
  %v943 = vld [vmem:[%s7 + $0x30] sm:$0xf]
  %v944 = vld [vmem:[%s7 + $0x34] sm:$0xf]
  %v945 = vld [vmem:[%s7 + $0x38] sm:$0xf]
  %v946 = vld [vmem:[%s7 + $0x3c] sm:$0xf]
  %v963 = vunpack.c.l.b16 %v931
  %v964 = vunpack.c.l.b16 %v932
  %v965 = vunpack.c.l.b16 %v933
  %v966 = vunpack.c.l.b16 %v934
  %v967 = vunpack.c.l.b16 %v935
  %v968 = vunpack.c.l.b16 %v936
  %v969 = vunpack.c.l.b16 %v937
  %v970 = vunpack.c.l.b16 %v938
  %v971 = vunpack.c.l.b16 %v939
  %v972 = vunpack.c.l.b16 %v940
  %v973 = vunpack.c.l.b16 %v941
  %v974 = vunpack.c.l.b16 %v942
  %v975 = vunpack.c.l.b16 %v943
  %v976 = vunpack.c.l.b16 %v944
  %v977 = vunpack.c.l.b16 %v945
  %v978 = vunpack.c.l.b16 %v946
  %v979 = vpack.c.b16 %v964, %v963
  %v980 = vpack.c.b16 %v966, %v965
  %v981 = vpack.c.b16 %v968, %v967
  %v982 = vpack.c.b16 %v970, %v969
  %v983 = vpack.c.b16 %v972, %v971
  %v984 = vpack.c.b16 %v974, %v973
  %v985 = vpack.c.b16 %v976, %v975
  %v986 = vpack.c.b16 %v978, %v977
  %995 = vmatprep.subr.bf16.mxu0 0
  %996 = vmatpush1.bf16.msra.mxu0 %v986
  %997 = vmatprep.subr.bf16.mxu0 0
  %998 = vmatpush1.bf16.msra.mxu0 %v985
  %999 = vmatprep.subr.bf16.mxu0 0
  %1000 = vmatpush1.bf16.msra.mxu0 %v984
  %1001 = vmatprep.subr.bf16.mxu0 0
  %1002 = vmatpush1.bf16.msra.mxu0 %v983
  %1003 = vmatprep.subr.bf16.mxu0 0
  %1004 = vmatpush1.bf16.msra.mxu0 %v982
  %1005 = vmatprep.subr.bf16.mxu0 0
  %1006 = vmatpush1.bf16.msra.mxu0 %v981
  %1007 = vmatprep.subr.bf16.mxu0 0
  %1008 = vmatpush1.bf16.msra.mxu0 %v980
  %1009 = vmatprep.subr.bf16.mxu0 0
  %1010 = vmatpush1.bf16.msra.mxu0 %v979
  %1011 = vmatprep.subr.bf16.mxu0 0
  %1012 = vmatpush2.bf16.msra.mxu0 0
  %1013 = vmatprep.subr.bf16.mxu0 0
  %1014 = vmatpush2.bf16.msra.mxu0 0
  %1015 = vmatprep.subr.bf16.mxu0 0
  %1016 = vmatpush2.bf16.msra.mxu0 0
  %1017 = vmatprep.subr.bf16.mxu0 0
  %1018 = vmatpush2.bf16.msra.mxu0 0
  %1019 = vmatprep.subr.bf16.mxu0 0
  %1020 = vmatpush2.bf16.msra.mxu0 0
  %1021 = vmatprep.subr.bf16.mxu0 0
  %1022 = vmatpush2.bf16.msra.mxu0 0
  %1023 = vmatprep.subr.bf16.mxu0 0
  %1024 = vmatpush2.bf16.msra.mxu0 0
  %1025 = vmatprep.subr.bf16.mxu0 0
  %1026 = vmatpush2.bf16.msra.mxu0 0
  %1027 = vmatprep.mubr.bf16.mxu0 0
  %1028 = vmatmul.mubr.bf16.gmra.mxu0 %v746
  %v1029 = vpop.f32.mrf.mxu0
  %v1030 = vadd.f32 0.0, %v1029
  %v1031 = vpop.f32.mrf.mxu0
  %v1032 = vpop.f32.mrf.mxu0
  %v1033 = vadd.f32 0.0, %v1032
  %v1034 = vpop.f32.mrf.mxu0
  %1035 = vmatprep.mubr.bf16.mxu0 0
  %1036 = vmatmul.mubr.bf16.gmra.mxu0 %v747
  %v1037 = vpop.f32.mrf.mxu0
  %v1038 = vadd.f32 0.0, %v1037
  %v1039 = vpop.f32.mrf.mxu0
  %v1040 = vpop.f32.mrf.mxu0
  %v1041 = vadd.f32 0.0, %v1040
  %v1042 = vpop.f32.mrf.mxu0
  %1043 = vmatprep.mubr.bf16.mxu0 0
  %1044 = vmatmul.mubr.bf16.gmra.mxu0 %v748
  %v1045 = vpop.f32.mrf.mxu0
  %v1046 = vadd.f32 0.0, %v1045
  %v1047 = vpop.f32.mrf.mxu0
  %v1048 = vpop.f32.mrf.mxu0
  %v1049 = vadd.f32 0.0, %v1048
  %v1050 = vpop.f32.mrf.mxu0
  %1051 = vmatprep.mubr.bf16.mxu0 0
  %1052 = vmatmul.mubr.bf16.gmra.mxu0 %v749
  %v1053 = vpop.f32.mrf.mxu0
  %v1054 = vadd.f32 0.0, %v1053
  %v1055 = vpop.f32.mrf.mxu0
  %v1056 = vpop.f32.mrf.mxu0
  %v1057 = vadd.f32 0.0, %v1056
  %v1058 = vpop.f32.mrf.mxu0
  %1059 = vmatprep.mubr.bf16.mxu0 0
  %1060 = vmatmul.mubr.bf16.gmra.mxu0 %v750
  %v1061 = vpop.f32.mrf.mxu0
  %v1062 = vadd.f32 0.0, %v1061
  %v1063 = vpop.f32.mrf.mxu0
  %v1064 = vpop.f32.mrf.mxu0
  %v1065 = vadd.f32 0.0, %v1064
  %v1066 = vpop.f32.mrf.mxu0
  %1067 = vmatprep.mubr.bf16.mxu0 0
  %1068 = vmatmul.mubr.bf16.gmra.mxu0 %v751
  %v1069 = vpop.f32.mrf.mxu0
  %v1070 = vadd.f32 0.0, %v1069
  %v1071 = vpop.f32.mrf.mxu0
  %v1072 = vpop.f32.mrf.mxu0
  %v1073 = vadd.f32 0.0, %v1072
  %v1074 = vpop.f32.mrf.mxu0
  %1075 = vmatprep.mubr.bf16.mxu0 0
  %1076 = vmatmul.mubr.bf16.gmra.mxu0 %v752
  %v1077 = vpop.f32.mrf.mxu0
  %v1078 = vadd.f32 0.0, %v1077
  %v1079 = vpop.f32.mrf.mxu0
  %v1080 = vpop.f32.mrf.mxu0
  %v1081 = vadd.f32 0.0, %v1080
  %v1082 = vpop.f32.mrf.mxu0
  %1083 = vmatprep.mubr.bf16.mxu0 0
  %1084 = vmatmul.mubr.bf16.gmra.mxu0 %v753
  %v1085 = vpop.f32.mrf.mxu0
  %v1086 = vadd.f32 0.0, %v1085
  %v1087 = vpop.f32.mrf.mxu0
  %v1088 = vpop.f32.mrf.mxu0
  %v1089 = vadd.f32 0.0, %v1088
  %v1090 = vpop.f32.mrf.mxu0
  %1091 = vdwg.mxu0
  %1092 = vst [vmem:[%s9] sm:$0xff] %v1030
  %1093 = vst [vmem:[%s9 + $0x8] sm:$0xff] %v1033
  %1094 = vst [vmem:[%s9 + $0x10] sm:$0xff] %v1038
  %1095 = vst [vmem:[%s9 + $0x18] sm:$0xff] %v1041
  %1096 = vst [vmem:[%s9 + $0x20] sm:$0xff] %v1046
  %1097 = vst [vmem:[%s9 + $0x28] sm:$0xff] %v1049
  %1098 = vst [vmem:[%s9 + $0x30] sm:$0xff] %v1054
  %1099 = vst [vmem:[%s9 + $0x38] sm:$0xff] %v1057
  %1100 = vst [vmem:[%s9 + $0x40] sm:$0xff] %v1062
  %1101 = vst [vmem:[%s9 + $0x48] sm:$0xff] %v1065
  %1102 = vst [vmem:[%s9 + $0x50] sm:$0xff] %v1070
  %1103 = vst [vmem:[%s9 + $0x58] sm:$0xff] %v1073
  %1104 = vst [vmem:[%s9 + $0x60] sm:$0xff] %v1078
  %1105 = vst [vmem:[%s9 + $0x68] sm:$0xff] %v1081
  %1106 = vst [vmem:[%s9 + $0x70] sm:$0xff] %v1086
  %1107 = vst [vmem:[%s9 + $0x78] sm:$0xff] %v1089
  // Predicated region
  $region34: #{edge_encoder_forward.2} parent=0 // pred_check
    _
  $region35: #{edge_encoder_forward.2} parent=0 // pred_check_branch
    %1109 = sbr.rel (0) target = $region37
  $region36: #{edge_encoder_forward.2} parent=0 // pred_region
    _
  $region37: #{edge_encoder_forward.2} parent=0 // pred_fallthru
    _
  // Predicated region
  $region38: #{edge_encoder_forward.2} parent=0 // pred_check
    _
  $region39: #{edge_encoder_forward.2} parent=0 // pred_check_branch
    %1111 = sbr.rel (0) target = $region41
  $region40: #{edge_encoder_forward.2} parent=0 // pred_region
    _
  $region41: #{edge_encoder_forward.2} parent=0 // pred_fallthru
    _
  // Predicated region
  $region42: #{edge_encoder_forward.2} parent=0 // pred_check
    _
  $region43: #{edge_encoder_forward.2} parent=0 // pred_check_branch
    %1113 = sbr.rel (0) target = $region45
  $region44: #{edge_encoder_forward.2} parent=0 // pred_region
    _
  $region45: #{edge_encoder_forward.2} parent=0 // pred_fallthru
    _
  // Predicated region
  $region46: #{edge_encoder_forward.2} parent=0 // pred_check
    _
  $region47: #{edge_encoder_forward.2} parent=0 // pred_check_branch
    %1115 = sbr.rel (0) target = $region49
  $region48: #{edge_encoder_forward.2} parent=0 // pred_region
    _
  $region49: #{edge_encoder_forward.2} parent=0 // pred_fallthru
    _

</llo_original>
